<compile_context>
chip_gen: v6e
topology: v6e:2x2x1
jax: 0.10.0
libtpu: 0.0.40
codegen_flags: <defaults>
</compile_context>

<pallas_src>
import functools

import jax
import jax.numpy as jnp
from jax.experimental import pallas as pl
from jax.experimental.pallas import tpu as pltpu


# ---------------------------------------------------------------------------
# Tiled matmul + bias kernel (used for the hoisted input projection and fc).
# ---------------------------------------------------------------------------
def _matmul_bias_kernel(x_ref, w_ref, b_ref, o_ref):
    o_ref[...] = (jnp.dot(x_ref[...], w_ref[...],
                          preferred_element_type=jnp.float32)
                  + b_ref[...]).astype(o_ref.dtype)


def matmul_bias(x, w, b, *, block_n=256, block_v=512):
    """x: (N, K) @ w: (K, V) + b: (1, V) -> (N, V) f32, bf16 MXU operands.

    K (the contraction dim) is kept whole per block -- it is ninp/nhid here and
    always fits comfortably in VMEM for this model.
    """
    N, Kd = x.shape
    V = w.shape[1]
    tn = N if N <= block_n else block_n     # full dim or 8-aligned tile
    tv = V if V <= block_v else block_v     # full dim or 128-aligned lane-dense tile
    grid = (pl.cdiv(N, tn), pl.cdiv(V, tv))

    cost = pl.CostEstimate(
        flops=2 * N * Kd * V,
        transcendentals=0,
        bytes_accessed=N * Kd * 2 + Kd * V * 2 + V * 4 + N * V * 4,
    )
    return pl.pallas_call(
        _matmul_bias_kernel,
        out_shape=jax.ShapeDtypeStruct((N, V), jnp.float32),
        grid_spec=pltpu.PrefetchScalarGridSpec(
            num_scalar_prefetch=0,
            grid=grid,
            in_specs=[
                pl.BlockSpec((tn, Kd), lambda i, j: (i, 0)),
                pl.BlockSpec((Kd, tv), lambda i, j: (0, j)),
                pl.BlockSpec((1, tv), lambda i, j: (0, j)),
            ],
            out_specs=pl.BlockSpec((tn, tv), lambda i, j: (i, j)),
        ),
        compiler_params=pltpu.CompilerParams(
            dimension_semantics=("parallel", "parallel"),
            vmem_limit_bytes=64 * 1024 * 1024),
        cost_estimate=cost,
    )(x.astype(jnp.bfloat16), w.astype(jnp.bfloat16), b)


# ---------------------------------------------------------------------------
# Recurrent SC-LSTM kernel: grid over timestep blocks, fused gates.
#   xp  : (T, B, 4H+K)  precomputed x@W_x_cat + b_cat   (f32)
#   wh  : (H, 4H+K)     concatenated recurrent weights  (bf16, W_hr pre-scaled 0.5)
#   wdc : (K, H)        keyword -> cell weight          (bf16)
# The carries h/c/d live in the constant-index output blocks (hT/cT/dT), which
# stay VMEM-resident across the "arbitrary" time grid axis.
# ---------------------------------------------------------------------------
def _sclstm_rec_kernel(xp_ref, wh_ref, wdc_ref, h0_ref, c0_ref, d0_ref,
                       out_ref, hT_ref, cT_ref, dT_ref,
                       *, nhid, kvs, tt_block):
    @pl.when(pl.program_id(0) == 0)
    def _():
        hT_ref[...] = h0_ref[...]
        cT_ref[...] = c0_ref[...]
        dT_ref[...] = d0_ref[...]

    wh = wh_ref[...]      # (H, 4H+K)  bf16
    wdc = wdc_ref[...]    # (K, H)     bf16

    def step(tt, carry):
        h, c, d = carry                                        # f32 carries
        pre = xp_ref[tt] + jnp.dot(h.astype(wh.dtype), wh,
                                   preferred_element_type=jnp.float32)  # (B, 4H+K)
        i_g = jax.nn.sigmoid(pre[:, 0:nhid])
        f_g = jax.nn.sigmoid(pre[:, nhid:2 * nhid])
        g_g = jnp.tanh(pre[:, 2 * nhid:3 * nhid])
        o_g = jax.nn.sigmoid(pre[:, 3 * nhid:4 * nhid])
        r_g = jax.nn.sigmoid(pre[:, 4 * nhid:4 * nhid + kvs])  # 0.5*W_hr folded in
        d_new = r_g * d
        c_new = f_g * c + i_g * g_g + jnp.tanh(
            jnp.dot(d_new.astype(wdc.dtype), wdc,
                    preferred_element_type=jnp.float32))
        h_new = o_g * jnp.tanh(c_new)
        out_ref[tt] = h_new.astype(out_ref.dtype)
        return h_new, c_new, d_new

    h, c, d = jax.lax.fori_loop(
        0, tt_block, step,
        (hT_ref[...], cT_ref[...], dT_ref[...]),
        unroll=True)

    hT_ref[...] = h
    cT_ref[...] = c
    dT_ref[...] = d


def sclstm_recurrence(xp, wh_cat, wdc, h0, c0, d0, *, nhid, kvs):
    """xp: (T, B, 4H+K) -> (out (T,B,H), hT (B,H), cT (B,H), dT (B,K))."""
    T, B, G = xp.shape
    H, K = nhid, kvs
    f32 = jnp.float32

    # Block several timesteps per grid step (amortize per-step overhead/DMAs).
    tt_block = 1
    for cand in (32, 16, 8, 4, 2, 1):
        if T % cand == 0:
            tt_block = cand
            break
    grid = (T // tt_block,)

    # TODO(synk): for large nhid on v7x, single-buffer the constant weight
    # BlockSpecs (pipeline_mode=pl.Buffered(1)) so W_h_cat/W_dc are not
    # double-buffered; unnecessary at these toy sizes.
    const2 = lambda t: (0, 0)

    cost = pl.CostEstimate(
        flops=2 * T * B * (H * G + K * H),
        transcendentals=T * B * (6 * H + K),
        bytes_accessed=(T * B * G * 4 + T * B * H * 4
                        + (H * G + K * H) * 2
                        + 2 * (2 * B * H + B * K) * 4),
    )

    kernel = functools.partial(_sclstm_rec_kernel, nhid=H, kvs=K,
                               tt_block=tt_block)
    return pl.pallas_call(
        kernel,
        out_shape=(
            jax.ShapeDtypeStruct((T, B, H), f32),
            jax.ShapeDtypeStruct((B, H), f32),
            jax.ShapeDtypeStruct((B, H), f32),
            jax.ShapeDtypeStruct((B, K), f32),
        ),
        grid_spec=pltpu.PrefetchScalarGridSpec(
            num_scalar_prefetch=0,
            grid=grid,
            in_specs=[
                pl.BlockSpec((tt_block, B, G), lambda t: (t, 0, 0)),  # x-projection
                pl.BlockSpec((H, G), const2),                          # W_h_cat
                pl.BlockSpec((K, H), const2),                          # W_dc
                pl.BlockSpec((B, H), const2),                          # h0
                pl.BlockSpec((B, H), const2),                          # c0
                pl.BlockSpec((B, K), const2),                          # d0
            ],
            out_specs=[
                pl.BlockSpec((tt_block, B, H), lambda t: (t, 0, 0)),   # per-step h
                pl.BlockSpec((B, H), const2),                          # final h (carry)
                pl.BlockSpec((B, H), const2),                          # final c (carry)
                pl.BlockSpec((B, K), const2),                          # final d (carry)
            ],
        ),
        compiler_params=pltpu.CompilerParams(
            dimension_semantics=("arbitrary",),
            vmem_limit_bytes=64 * 1024 * 1024),
        cost_estimate=cost,
    )(xp, wh_cat.astype(jnp.bfloat16), wdc.astype(jnp.bfloat16), h0, c0, d0)


# ---------------------------------------------------------------------------
# Parameter init (deterministic, mirrors module __init__ shapes).
# ---------------------------------------------------------------------------
def init_params(key, ntoken, ninp, nhid, nlayers, keyword_voc_size):
    initrange = 0.1
    keys = jax.random.split(key, 2 + nlayers)
    params = {
        "embedding": jax.random.uniform(keys[0], (ntoken, ninp),
                                        jnp.float32, -initrange, initrange),
        "fc_w": jax.random.uniform(keys[1], (nhid, ntoken),
                                   jnp.float32, -initrange, initrange),
        "fc_b": jnp.zeros((1, ntoken), jnp.float32),
        "layers": [],
    }
    for l in range(nlayers):
        din = ninp if l == 0 else nhid
        lk = jax.random.split(keys[2 + l], 6)
        s = 1.0 / jnp.sqrt(jnp.float32(nhid))
        layer = (
            jax.random.uniform(lk[0], (4, din, nhid), jnp.float32, -s, s),   # W_x
            jax.random.uniform(lk[1], (4, nhid, nhid), jnp.float32, -s, s),  # W_h
            jax.random.uniform(lk[2], (4, nhid), jnp.float32, -s, s),        # b
            jax.random.uniform(lk[3], (din, keyword_voc_size), jnp.float32, -s, s),   # W_xr
            jax.random.uniform(lk[4], (nhid, keyword_voc_size), jnp.float32, -s, s),  # W_hr
            jax.random.uniform(lk[5], (keyword_voc_size, nhid), jnp.float32, -s, s),  # W_dc
        )
        params["layers"].append(layer)
    return params


# ---------------------------------------------------------------------------
# Forward pass (matches CsLstmModel.forward semantics).
# ---------------------------------------------------------------------------
def cs_lstm_forward(params, tokens, hidden, d_act, *, ntoken, nlayers, nhid,
                    keyword_voc_size):
    # self.drop(...) is identity in eval mode.
    # TODO(synk): training-mode dropout not implemented (inference semantics).
    emb = jnp.take(params["embedding"], tokens, axis=0)   # (B, T, ninp) gather glue
    x = jnp.transpose(emb, (1, 0, 2))                     # (T, B, ninp)  time-major
    T, B, _ = x.shape
    G = 4 * nhid + keyword_voc_size

    h0_all, c0_all = hidden                               # (nlayers, B, nhid) each
    h_finals, c_finals = [], []
    # TODO(synk): the per-layer (T,B,H) activations round-trip through HBM;
    # fusing all layers (and fc) into one pallas_call would remove that traffic.
    for l in range(nlayers):
        wx, wh, b, wxr, whr, wdc = params["layers"][l]
        din = wx.shape[1]
        # Fused gate weights: [i | f | g | o | r].  0.5 factor on W_hr folded in,
        # bias (no bias on r) folded into the hoisted input projection.
        wx_cat = jnp.concatenate([wx[0], wx[1], wx[2], wx[3], wxr], axis=1)        # (Din, G)
        wh_cat = jnp.concatenate([wh[0], wh[1], wh[2], wh[3], 0.5 * whr], axis=1)  # (H, G)
        b_cat = jnp.concatenate(
            [b.reshape(-1), jnp.zeros((keyword_voc_size,), b.dtype)])[None, :]     # (1, G)

        # Hoisted input projection: one MXU-saturating matmul over all timesteps.
        xp = matmul_bias(x.reshape(T * B, din), wx_cat, b_cat).reshape(T, B, G)

        x, hT, cT, _dT = sclstm_recurrence(xp, wh_cat, wdc,
                                           h0_all[l], c0_all[l], d_act,
                                           nhid=nhid, kvs=keyword_voc_size)
        h_finals.append(hT)
        c_finals.append(cT)

    logits = matmul_bias(x.reshape(T * B, nhid), params["fc_w"], params["fc_b"])
    logits = logits.reshape(T, B, ntoken)
    new_hidden = (jnp.stack(h_finals), jnp.stack(c_finals))
    return logits, new_hidden


def init_hidden(nlayers, batch_size, nhid):
    return (jnp.zeros((nlayers, batch_size, nhid), jnp.float32),
            jnp.zeros((nlayers, batch_size, nhid), jnp.float32))


if __name__ == "__main__":
    # Small deterministic config (tie_weights-compatible: nhid == ninp).
    ntoken = 50
    ninp = 32
    nhid = 32
    nlayers = 2
    keyword_voc_size = 16
    batch_size = 2
    seq_len = 8

    key = jax.random.PRNGKey(0)
    k_params, k_tok, k_dact = jax.random.split(key, 3)

    params = init_params(k_params, ntoken, ninp, nhid, nlayers, keyword_voc_size)

    tokens = jax.random.randint(k_tok, (batch_size, seq_len), 0, ntoken, jnp.int32)
    d_act = jax.random.bernoulli(k_dact, 0.3,
                                 (batch_size, keyword_voc_size)).astype(jnp.float32)
    hidden = init_hidden(nlayers, batch_size, nhid)

    fwd = jax.jit(functools.partial(cs_lstm_forward, ntoken=ntoken,
                                    nlayers=nlayers, nhid=nhid,
                                    keyword_voc_size=keyword_voc_size))
    logits, (h_n, c_n) = fwd(params, tokens, hidden, d_act)
    jax.block_until_ready((logits, h_n, c_n))

    assert logits.shape == (seq_len, batch_size, ntoken), logits.shape
    assert h_n.shape == (nlayers, batch_size, nhid), h_n.shape
    assert c_n.shape == (nlayers, batch_size, nhid), c_n.shape
    assert bool(jnp.all(jnp.isfinite(logits)))

    print("KERNEL_OK")
</pallas_src>

<mosaic_0001>
module attributes {stable_mosaic.version = 11 : i64} {
  func.func @_matmul_bias_kernel(%arg0: i32, %arg1: i32, %arg2: memref<16x32xbf16, #tpu.memory_space<vmem>>, %arg3: memref<32x144xbf16, #tpu.memory_space<vmem>>, %arg4: memref<1x144xf32, #tpu.memory_space<vmem>>, %arg5: memref<16x144xf32, #tpu.memory_space<vmem>>) attributes {dimension_semantics = [#tpu.dimension_semantics<parallel>, #tpu.dimension_semantics<parallel>], iteration_bounds = array<i64: 1, 1>, scalar_prefetch = 0 : i64, scratch_operands = 0 : i64, tpu.core_type = #tpu.core_type<tc>, window_params = [{transform_indices = @transform_0, window_bounds = array<i64: 16, 32>}, {transform_indices = @transform_1, window_bounds = array<i64: 32, 144>}, {transform_indices = @transform_2, window_bounds = array<i64: 1, 144>}, {transform_indices = @transform_3, window_bounds = array<i64: 16, 144>}]} {
    %c0 = arith.constant 0 : index
    %c0_0 = arith.constant 0 : index
    %0 = vector.load %arg2[%c0, %c0_0] : memref<16x32xbf16, #tpu.memory_space<vmem>>, vector<16x32xbf16>
    %c0_1 = arith.constant 0 : index
    %c0_2 = arith.constant 0 : index
    %1 = vector.load %arg3[%c0_1, %c0_2] : memref<32x144xbf16, #tpu.memory_space<vmem>>, vector<32x144xbf16>
    %cst = arith.constant dense<0.000000e+00> : vector<16x144xf32>
    %2 = tpu.matmul %0, %1, %cst {dimension_numbers = #tpu.dot_dimension_numbers<[1], [0], [0], [1], [0, 0, 1, 1], [], []>} : vector<16x32xbf16>, vector<32x144xbf16>, vector<16x144xf32> -> vector<16x144xf32>
    %c0_3 = arith.constant 0 : index
    %c0_4 = arith.constant 0 : index
    %3 = vector.load %arg4[%c0_3, %c0_4] : memref<1x144xf32, #tpu.memory_space<vmem>>, vector<1x144xf32>
    %4 = vector.broadcast %3 : vector<1x144xf32> to vector<16x144xf32>
    %5 = arith.addf %2, %4 : vector<16x144xf32>
    %c0_5 = arith.constant 0 : index
    %c0_6 = arith.constant 0 : index
    %6 = vector.load %arg5[%c0_5, %c0_6] : memref<16x144xf32, #tpu.memory_space<vmem>>, vector<16x144xf32>
    tpu.vector_store %arg5[%c0_5, %c0_6], %5 {strides = array<i32>} : memref<16x144xf32, #tpu.memory_space<vmem>>, vector<16x144xf32>,
    return
  }
  func.func @transform_0(%arg0: i32, %arg1: i32) -> (i32, i32) {
    %c0_i32 = arith.constant 0 : i32
    %c0_i32_0 = arith.constant 0 : i32
    return %arg0, %c0_i32 : i32, i32
  }
  func.func @transform_1(%arg0: i32, %arg1: i32) -> (i32, i32) {
    %c0_i32 = arith.constant 0 : i32
    %c0_i32_0 = arith.constant 0 : i32
    return %c0_i32, %arg1 : i32, i32
  }
  func.func @transform_2(%arg0: i32, %arg1: i32) -> (i32, i32) {
    %c0_i32 = arith.constant 0 : i32
    %c0_i32_0 = arith.constant 0 : i32
    return %c0_i32, %arg1 : i32, i32
  }
  func.func @transform_3(%arg0: i32, %arg1: i32) -> (i32, i32) {
    %c0_i32 = arith.constant 0 : i32
    return %arg0, %arg1 : i32, i32
  }
}

module attributes {stable_mosaic.version = 11 : i64} {
  func.func @_matmul_bias_kernel(%arg0: i32, %arg1: i32, %arg2: memref<16x32xbf16, #tpu.memory_space<vmem>>, %arg3: memref<32x50xbf16, #tpu.memory_space<vmem>>, %arg4: memref<1x50xf32, #tpu.memory_space<vmem>>, %arg5: memref<16x50xf32, #tpu.memory_space<vmem>>) attributes {dimension_semantics = [#tpu.dimension_semantics<parallel>, #tpu.dimension_semantics<parallel>], iteration_bounds = array<i64: 1, 1>, scalar_prefetch = 0 : i64, scratch_operands = 0 : i64, tpu.core_type = #tpu.core_type<tc>, window_params = [{transform_indices = @transform_0, window_bounds = array<i64: 16, 32>}, {transform_indices = @transform_1, window_bounds = array<i64: 32, 50>}, {transform_indices = @transform_2, window_bounds = array<i64: 1, 50>}, {transform_indices = @transform_3, window_bounds = array<i64: 16, 50>}]} {
    %c0 = arith.constant 0 : index
    %c0_0 = arith.constant 0 : index
    %0 = vector.load %arg2[%c0, %c0_0] : memref<16x32xbf16, #tpu.memory_space<vmem>>, vector<16x32xbf16>
    %c0_1 = arith.constant 0 : index
    %c0_2 = arith.constant 0 : index
    %1 = vector.load %arg3[%c0_1, %c0_2] : memref<32x50xbf16, #tpu.memory_space<vmem>>, vector<32x50xbf16>
    %cst = arith.constant dense<0.000000e+00> : vector<16x50xf32>
    %2 = tpu.matmul %0, %1, %cst {dimension_numbers = #tpu.dot_dimension_numbers<[1], [0], [0], [1], [0, 0, 1, 1], [], []>} : vector<16x32xbf16>, vector<32x50xbf16>, vector<16x50xf32> -> vector<16x50xf32>
    %c0_3 = arith.constant 0 : index
    %c0_4 = arith.constant 0 : index
    %3 = vector.load %arg4[%c0_3, %c0_4] : memref<1x50xf32, #tpu.memory_space<vmem>>, vector<1x50xf32>
    %4 = vector.broadcast %3 : vector<1x50xf32> to vector<16x50xf32>
    %5 = arith.addf %2, %4 : vector<16x50xf32>
    %c0_5 = arith.constant 0 : index
    %c0_6 = arith.constant 0 : index
    %6 = vector.load %arg5[%c0_5, %c0_6] : memref<16x50xf32, #tpu.memory_space<vmem>>, vector<16x50xf32>
    tpu.vector_store %arg5[%c0_5, %c0_6], %5 {strides = array<i32>} : memref<16x50xf32, #tpu.memory_space<vmem>>, vector<16x50xf32>,
    return
  }
  func.func @transform_0(%arg0: i32, %arg1: i32) -> (i32, i32) {
    %c0_i32 = arith.constant 0 : i32
    %c0_i32_0 = arith.constant 0 : i32
    return %arg0, %c0_i32 : i32, i32
  }
  func.func @transform_1(%arg0: i32, %arg1: i32) -> (i32, i32) {
    %c0_i32 = arith.constant 0 : i32
    %c0_i32_0 = arith.constant 0 : i32
    return %c0_i32, %arg1 : i32, i32
  }
  func.func @transform_2(%arg0: i32, %arg1: i32) -> (i32, i32) {
    %c0_i32 = arith.constant 0 : i32
    %c0_i32_0 = arith.constant 0 : i32
    return %c0_i32, %arg1 : i32, i32
  }
  func.func @transform_3(%arg0: i32, %arg1: i32) -> (i32, i32) {
    %c0_i32 = arith.constant 0 : i32
    return %arg0, %arg1 : i32, i32
  }
}

module attributes {stable_mosaic.version = 11 : i64} {
  func.func @_sclstm_rec_kernel(%arg0: i32, %arg1: memref<8x2x144xf32, #tpu.memory_space<vmem>>, %arg2: memref<32x144xbf16, #tpu.memory_space<vmem>>, %arg3: memref<16x32xbf16, #tpu.memory_space<vmem>>, %arg4: memref<2x32xf32, #tpu.memory_space<vmem>>, %arg5: memref<2x32xf32, #tpu.memory_space<vmem>>, %arg6: memref<2x16xf32, #tpu.memory_space<vmem>>, %arg7: memref<8x2x32xf32, #tpu.memory_space<vmem>>, %arg8: memref<2x32xf32, #tpu.memory_space<vmem>>, %arg9: memref<2x32xf32, #tpu.memory_space<vmem>>, %arg10: memref<2x16xf32, #tpu.memory_space<vmem>>) attributes {dimension_semantics = [#tpu.dimension_semantics<arbitrary>], iteration_bounds = array<i64: 1>, scalar_prefetch = 0 : i64, scratch_operands = 0 : i64, tpu.core_type = #tpu.core_type<tc>, window_params = [{transform_indices = @transform_0, window_bounds = array<i64: 8, 2, 144>}, {pipeline_mode = #tpu.pipeline_mode<synchronous>, transform_indices = @transform_1, window_bounds = array<i64: 32, 144>}, {pipeline_mode = #tpu.pipeline_mode<synchronous>, transform_indices = @transform_2, window_bounds = array<i64: 16, 32>}, {pipeline_mode = #tpu.pipeline_mode<synchronous>, transform_indices = @transform_3, window_bounds = array<i64: 2, 32>}, {pipeline_mode = #tpu.pipeline_mode<synchronous>, transform_indices = @transform_4, window_bounds = array<i64: 2, 32>}, {pipeline_mode = #tpu.pipeline_mode<synchronous>, transform_indices = @transform_5, window_bounds = array<i64: 2, 16>}, {transform_indices = @transform_6, window_bounds = array<i64: 8, 2, 32>}, {pipeline_mode = #tpu.pipeline_mode<synchronous>, transform_indices = @transform_7, window_bounds = array<i64: 2, 32>}, {pipeline_mode = #tpu.pipeline_mode<synchronous>, transform_indices = @transform_8, window_bounds = array<i64: 2, 32>}, {pipeline_mode = #tpu.pipeline_mode<synchronous>, transform_indices = @transform_9, window_bounds = array<i64: 2, 16>}]} {
    %c0_i32 = arith.constant 0 : i32
    %0 = arith.cmpi eq, %arg0, %c0_i32 : i32
    %1 = arith.extui %0 : i1 to i32
    %c0_i32_0 = arith.constant 0 : i32
    %2 = arith.cmpi ne, %1, %c0_i32_0 : i32
    scf.if %2 {
      %c0_96 = arith.constant 0 : index
      %c0_97 = arith.constant 0 : index
      %379 = vector.load %arg4[%c0_96, %c0_97] : memref<2x32xf32, #tpu.memory_space<vmem>>, vector<2x32xf32>
      %c0_98 = arith.constant 0 : index
      %c0_99 = arith.constant 0 : index
      %380 = vector.load %arg8[%c0_98, %c0_99] : memref<2x32xf32, #tpu.memory_space<vmem>>, vector<2x32xf32>
      tpu.vector_store %arg8[%c0_98, %c0_99], %379 {strides = array<i32>} : memref<2x32xf32, #tpu.memory_space<vmem>>, vector<2x32xf32>,
      %c0_100 = arith.constant 0 : index
      %c0_101 = arith.constant 0 : index
      %381 = vector.load %arg5[%c0_100, %c0_101] : memref<2x32xf32, #tpu.memory_space<vmem>>, vector<2x32xf32>
      %c0_102 = arith.constant 0 : index
      %c0_103 = arith.constant 0 : index
      %382 = vector.load %arg9[%c0_102, %c0_103] : memref<2x32xf32, #tpu.memory_space<vmem>>, vector<2x32xf32>
      tpu.vector_store %arg9[%c0_102, %c0_103], %381 {strides = array<i32>} : memref<2x32xf32, #tpu.memory_space<vmem>>, vector<2x32xf32>,
      %c0_104 = arith.constant 0 : index
      %c0_105 = arith.constant 0 : index
      %383 = vector.load %arg6[%c0_104, %c0_105] : memref<2x16xf32, #tpu.memory_space<vmem>>, vector<2x16xf32>
      %c0_106 = arith.constant 0 : index
      %c0_107 = arith.constant 0 : index
      %384 = vector.load %arg10[%c0_106, %c0_107] : memref<2x16xf32, #tpu.memory_space<vmem>>, vector<2x16xf32>
      tpu.vector_store %arg10[%c0_106, %c0_107], %383 {strides = array<i32>} : memref<2x16xf32, #tpu.memory_space<vmem>>, vector<2x16xf32>,
    } else {
    }
    %c0 = arith.constant 0 : index
    %c0_1 = arith.constant 0 : index
    %3 = vector.load %arg2[%c0, %c0_1] : memref<32x144xbf16, #tpu.memory_space<vmem>>, vector<32x144xbf16>
    %c0_2 = arith.constant 0 : index
    %c0_3 = arith.constant 0 : index
    %4 = vector.load %arg3[%c0_2, %c0_3] : memref<16x32xbf16, #tpu.memory_space<vmem>>, vector<16x32xbf16>
    %c0_4 = arith.constant 0 : index
    %c0_5 = arith.constant 0 : index
    %5 = vector.load %arg8[%c0_4, %c0_5] : memref<2x32xf32, #tpu.memory_space<vmem>>, vector<2x32xf32>
    %c0_6 = arith.constant 0 : index
    %c0_7 = arith.constant 0 : index
    %6 = vector.load %arg9[%c0_6, %c0_7] : memref<2x32xf32, #tpu.memory_space<vmem>>, vector<2x32xf32>
    %c0_8 = arith.constant 0 : index
    %c0_9 = arith.constant 0 : index
    %7 = vector.load %arg10[%c0_8, %c0_9] : memref<2x16xf32, #tpu.memory_space<vmem>>, vector<2x16xf32>
    %c0_i32_10 = arith.constant 0 : i32
    %8 = arith.index_cast %c0_i32_10 : i32 to index
    %c0_11 = arith.constant 0 : index
    %c0_12 = arith.constant 0 : index
    %9 = vector.load %arg1[%8, %c0_11, %c0_12] : memref<8x2x144xf32, #tpu.memory_space<vmem>>, vector<1x2x144xf32>
    %10 = vector.shape_cast %9 : vector<1x2x144xf32> to vector<2x144xf32>
    %11 = arith.truncf %5 : vector<2x32xf32> to vector<2x32xbf16>
    %cst = arith.constant dense<0.000000e+00> : vector<2x144xf32>
    %12 = tpu.matmul %11, %3, %cst {dimension_numbers = #tpu.dot_dimension_numbers<[1], [0], [0], [1], [0, 0, 1, 1], [], []>} : vector<2x32xbf16>, vector<32x144xbf16>, vector<2x144xf32> -> vector<2x144xf32>
    %13 = arith.addf %10, %12 : vector<2x144xf32>
    %14 = vector.extract_strided_slice %13 {offsets = [0, 0], sizes = [2, 32], strides = [1, 1]} : vector<2x144xf32> to vector<2x32xf32>
    %15 = arith.negf %14 : vector<2x32xf32>
    %16 = math.exp %15 : vector<2x32xf32>
    %cst_13 = arith.constant 1.000000e+00 : f32
    %17 = vector.broadcast %cst_13 : f32 to vector<2x32xf32>
    %18 = arith.addf %17, %16 : vector<2x32xf32>
    %19 = arith.divf %17, %18 : vector<2x32xf32>
    %20 = vector.extract_strided_slice %13 {offsets = [0, 32], sizes = [2, 32], strides = [1, 1]} : vector<2x144xf32> to vector<2x32xf32>
    %21 = arith.negf %20 : vector<2x32xf32>
    %22 = math.exp %21 : vector<2x32xf32>
    %cst_14 = arith.constant 1.000000e+00 : f32
    %23 = vector.broadcast %cst_14 : f32 to vector<2x32xf32>
    %24 = arith.addf %23, %22 : vector<2x32xf32>
    %25 = arith.divf %23, %24 : vector<2x32xf32>
    %26 = vector.extract_strided_slice %13 {offsets = [0, 64], sizes = [2, 32], strides = [1, 1]} : vector<2x144xf32> to vector<2x32xf32>
    %27 = math.tanh %26 : vector<2x32xf32>
    %28 = vector.extract_strided_slice %13 {offsets = [0, 96], sizes = [2, 32], strides = [1, 1]} : vector<2x144xf32> to vector<2x32xf32>
    %29 = arith.negf %28 : vector<2x32xf32>
    %30 = math.exp %29 : vector<2x32xf32>
    %cst_15 = arith.constant 1.000000e+00 : f32
    %31 = vector.broadcast %cst_15 : f32 to vector<2x32xf32>
    %32 = arith.addf %31, %30 : vector<2x32xf32>
    %33 = arith.divf %31, %32 : vector<2x32xf32>
    %34 = vector.extract_strided_slice %13 {offsets = [0, 128], sizes = [2, 16], strides = [1, 1]} : vector<2x144xf32> to vector<2x16xf32>
    %35 = arith.negf %34 : vector<2x16xf32>
    %36 = math.exp %35 : vector<2x16xf32>
    %cst_16 = arith.constant 1.000000e+00 : f32
    %37 = vector.broadcast %cst_16 : f32 to vector<2x16xf32>
    %38 = arith.addf %37, %36 : vector<2x16xf32>
    %39 = arith.divf %37, %38 : vector<2x16xf32>
    %40 = arith.mulf %39, %7 : vector<2x16xf32>
    %41 = arith.mulf %25, %6 : vector<2x32xf32>
    %42 = arith.mulf %19, %27 : vector<2x32xf32>
    %43 = arith.addf %41, %42 : vector<2x32xf32>
    %44 = arith.truncf %40 : vector<2x16xf32> to vector<2x16xbf16>
    %cst_17 = arith.constant dense<0.000000e+00> : vector<2x32xf32>
    %45 = tpu.matmul %44, %4, %cst_17 {dimension_numbers = #tpu.dot_dimension_numbers<[1], [0], [0], [1], [0, 0, 1, 1], [], []>} : vector<2x16xbf16>, vector<16x32xbf16>, vector<2x32xf32> -> vector<2x32xf32>
    %46 = math.tanh %45 : vector<2x32xf32>
    %47 = arith.addf %43, %46 : vector<2x32xf32>
    %48 = math.tanh %47 : vector<2x32xf32>
    %49 = arith.mulf %33, %48 : vector<2x32xf32>
    %50 = arith.index_cast %c0_i32_10 : i32 to index
    %c0_18 = arith.constant 0 : index
    %c0_19 = arith.constant 0 : index
    %51 = vector.load %arg7[%50, %c0_18, %c0_19] : memref<8x2x32xf32, #tpu.memory_space<vmem>>, vector<1x2x32xf32>
    %52 = vector.shape_cast %51 : vector<1x2x32xf32> to vector<2x32xf32>
    %53 = vector.shape_cast %49 : vector<2x32xf32> to vector<1x2x32xf32>
    tpu.vector_store %arg7[%50, %c0_18, %c0_19], %53 {strides = array<i32>} : memref<8x2x32xf32, #tpu.memory_space<vmem>>, vector<1x2x32xf32>,
    %c1_i32 = arith.constant 1 : i32
    %54 = arith.index_cast %c1_i32 : i32 to index
    %c0_20 = arith.constant 0 : index
    %c0_21 = arith.constant 0 : index
    %55 = vector.load %arg1[%54, %c0_20, %c0_21] : memref<8x2x144xf32, #tpu.memory_space<vmem>>, vector<1x2x144xf32>
    %56 = vector.shape_cast %55 : vector<1x2x144xf32> to vector<2x144xf32>
    %57 = arith.truncf %49 : vector<2x32xf32> to vector<2x32xbf16>
    %cst_22 = arith.constant dense<0.000000e+00> : vector<2x144xf32>
    %58 = tpu.matmul %57, %3, %cst_22 {dimension_numbers = #tpu.dot_dimension_numbers<[1], [0], [0], [1], [0, 0, 1, 1], [], []>} : vector<2x32xbf16>, vector<32x144xbf16>, vector<2x144xf32> -> vector<2x144xf32>
    %59 = arith.addf %56, %58 : vector<2x144xf32>
    %60 = vector.extract_strided_slice %59 {offsets = [0, 0], sizes = [2, 32], strides = [1, 1]} : vector<2x144xf32> to vector<2x32xf32>
    %61 = arith.negf %60 : vector<2x32xf32>
    %62 = math.exp %61 : vector<2x32xf32>
    %cst_23 = arith.constant 1.000000e+00 : f32
    %63 = vector.broadcast %cst_23 : f32 to vector<2x32xf32>
    %64 = arith.addf %63, %62 : vector<2x32xf32>
    %65 = arith.divf %63, %64 : vector<2x32xf32>
    %66 = vector.extract_strided_slice %59 {offsets = [0, 32], sizes = [2, 32], strides = [1, 1]} : vector<2x144xf32> to vector<2x32xf32>
    %67 = arith.negf %66 : vector<2x32xf32>
    %68 = math.exp %67 : vector<2x32xf32>
    %cst_24 = arith.constant 1.000000e+00 : f32
    %69 = vector.broadcast %cst_24 : f32 to vector<2x32xf32>
    %70 = arith.addf %69, %68 : vector<2x32xf32>
    %71 = arith.divf %69, %70 : vector<2x32xf32>
    %72 = vector.extract_strided_slice %59 {offsets = [0, 64], sizes = [2, 32], strides = [1, 1]} : vector<2x144xf32> to vector<2x32xf32>
    %73 = math.tanh %72 : vector<2x32xf32>
    %74 = vector.extract_strided_slice %59 {offsets = [0, 96], sizes = [2, 32], strides = [1, 1]} : vector<2x144xf32> to vector<2x32xf32>
    %75 = arith.negf %74 : vector<2x32xf32>
    %76 = math.exp %75 : vector<2x32xf32>
    %cst_25 = arith.constant 1.000000e+00 : f32
    %77 = vector.broadcast %cst_25 : f32 to vector<2x32xf32>
    %78 = arith.addf %77, %76 : vector<2x32xf32>
    %79 = arith.divf %77, %78 : vector<2x32xf32>
    %80 = vector.extract_strided_slice %59 {offsets = [0, 128], sizes = [2, 16], strides = [1, 1]} : vector<2x144xf32> to vector<2x16xf32>
    %81 = arith.negf %80 : vector<2x16xf32>
    %82 = math.exp %81 : vector<2x16xf32>
    %cst_26 = arith.constant 1.000000e+00 : f32
    %83 = vector.broadcast %cst_26 : f32 to vector<2x16xf32>
    %84 = arith.addf %83, %82 : vector<2x16xf32>
    %85 = arith.divf %83, %84 : vector<2x16xf32>
    %86 = arith.mulf %85, %40 : vector<2x16xf32>
    %87 = arith.mulf %71, %47 : vector<2x32xf32>
    %88 = arith.mulf %65, %73 : vector<2x32xf32>
    %89 = arith.addf %87, %88 : vector<2x32xf32>
    %90 = arith.truncf %86 : vector<2x16xf32> to vector<2x16xbf16>
    %cst_27 = arith.constant dense<0.000000e+00> : vector<2x32xf32>
    %91 = tpu.matmul %90, %4, %cst_27 {dimension_numbers = #tpu.dot_dimension_numbers<[1], [0], [0], [1], [0, 0, 1, 1], [], []>} : vector<2x16xbf16>, vector<16x32xbf16>, vector<2x32xf32> -> vector<2x32xf32>
    %92 = math.tanh %91 : vector<2x32xf32>
    %93 = arith.addf %89, %92 : vector<2x32xf32>
    %94 = math.tanh %93 : vector<2x32xf32>
    %95 = arith.mulf %79, %94 : vector<2x32xf32>
    %96 = arith.index_cast %c1_i32 : i32 to index
    %c0_28 = arith.constant 0 : index
    %c0_29 = arith.constant 0 : index
    %97 = vector.load %arg7[%96, %c0_28, %c0_29] : memref<8x2x32xf32, #tpu.memory_space<vmem>>, vector<1x2x32xf32>
    %98 = vector.shape_cast %97 : vector<1x2x32xf32> to vector<2x32xf32>
    %99 = vector.shape_cast %95 : vector<2x32xf32> to vector<1x2x32xf32>
    tpu.vector_store %arg7[%96, %c0_28, %c0_29], %99 {strides = array<i32>} : memref<8x2x32xf32, #tpu.memory_space<vmem>>, vector<1x2x32xf32>,
    %c2_i32 = arith.constant 2 : i32
    %100 = arith.index_cast %c2_i32 : i32 to index
    %c0_30 = arith.constant 0 : index
    %c0_31 = arith.constant 0 : index
    %101 = vector.load %arg1[%100, %c0_30, %c0_31] : memref<8x2x144xf32, #tpu.memory_space<vmem>>, vector<1x2x144xf32>
    %102 = vector.shape_cast %101 : vector<1x2x144xf32> to vector<2x144xf32>
    %103 = arith.truncf %95 : vector<2x32xf32> to vector<2x32xbf16>
    %cst_32 = arith.constant dense<0.000000e+00> : vector<2x144xf32>
    %104 = tpu.matmul %103, %3, %cst_32 {dimension_numbers = #tpu.dot_dimension_numbers<[1], [0], [0], [1], [0, 0, 1, 1], [], []>} : vector<2x32xbf16>, vector<32x144xbf16>, vector<2x144xf32> -> vector<2x144xf32>
    %105 = arith.addf %102, %104 : vector<2x144xf32>
    %106 = vector.extract_strided_slice %105 {offsets = [0, 0], sizes = [2, 32], strides = [1, 1]} : vector<2x144xf32> to vector<2x32xf32>
    %107 = arith.negf %106 : vector<2x32xf32>
    %108 = math.exp %107 : vector<2x32xf32>
    %cst_33 = arith.constant 1.000000e+00 : f32
    %109 = vector.broadcast %cst_33 : f32 to vector<2x32xf32>
    %110 = arith.addf %109, %108 : vector<2x32xf32>
    %111 = arith.divf %109, %110 : vector<2x32xf32>
    %112 = vector.extract_strided_slice %105 {offsets = [0, 32], sizes = [2, 32], strides = [1, 1]} : vector<2x144xf32> to vector<2x32xf32>
    %113 = arith.negf %112 : vector<2x32xf32>
    %114 = math.exp %113 : vector<2x32xf32>
    %cst_34 = arith.constant 1.000000e+00 : f32
    %115 = vector.broadcast %cst_34 : f32 to vector<2x32xf32>
    %116 = arith.addf %115, %114 : vector<2x32xf32>
    %117 = arith.divf %115, %116 : vector<2x32xf32>
    %118 = vector.extract_strided_slice %105 {offsets = [0, 64], sizes = [2, 32], strides = [1, 1]} : vector<2x144xf32> to vector<2x32xf32>
    %119 = math.tanh %118 : vector<2x32xf32>
    %120 = vector.extract_strided_slice %105 {offsets = [0, 96], sizes = [2, 32], strides = [1, 1]} : vector<2x144xf32> to vector<2x32xf32>
    %121 = arith.negf %120 : vector<2x32xf32>
    %122 = math.exp %121 : vector<2x32xf32>
    %cst_35 = arith.constant 1.000000e+00 : f32
    %123 = vector.broadcast %cst_35 : f32 to vector<2x32xf32>
    %124 = arith.addf %123, %122 : vector<2x32xf32>
    %125 = arith.divf %123, %124 : vector<2x32xf32>
    %126 = vector.extract_strided_slice %105 {offsets = [0, 128], sizes = [2, 16], strides = [1, 1]} : vector<2x144xf32> to vector<2x16xf32>
    %127 = arith.negf %126 : vector<2x16xf32>
    %128 = math.exp %127 : vector<2x16xf32>
    %cst_36 = arith.constant 1.000000e+00 : f32
    %129 = vector.broadcast %cst_36 : f32 to vector<2x16xf32>
    %130 = arith.addf %129, %128 : vector<2x16xf32>
    %131 = arith.divf %129, %130 : vector<2x16xf32>
    %132 = arith.mulf %131, %86 : vector<2x16xf32>
    %133 = arith.mulf %117, %93 : vector<2x32xf32>
    %134 = arith.mulf %111, %119 : vector<2x32xf32>
    %135 = arith.addf %133, %134 : vector<2x32xf32>
    %136 = arith.truncf %132 : vector<2x16xf32> to vector<2x16xbf16>
    %cst_37 = arith.constant dense<0.000000e+00> : vector<2x32xf32>
    %137 = tpu.matmul %136, %4, %cst_37 {dimension_numbers = #tpu.dot_dimension_numbers<[1], [0], [0], [1], [0, 0, 1, 1], [], []>} : vector<2x16xbf16>, vector<16x32xbf16>, vector<2x32xf32> -> vector<2x32xf32>
    %138 = math.tanh %137 : vector<2x32xf32>
    %139 = arith.addf %135, %138 : vector<2x32xf32>
    %140 = math.tanh %139 : vector<2x32xf32>
    %141 = arith.mulf %125, %140 : vector<2x32xf32>
    %142 = arith.index_cast %c2_i32 : i32 to index
    %c0_38 = arith.constant 0 : index
    %c0_39 = arith.constant 0 : index
    %143 = vector.load %arg7[%142, %c0_38, %c0_39] : memref<8x2x32xf32, #tpu.memory_space<vmem>>, vector<1x2x32xf32>
    %144 = vector.shape_cast %143 : vector<1x2x32xf32> to vector<2x32xf32>
    %145 = vector.shape_cast %141 : vector<2x32xf32> to vector<1x2x32xf32>
    tpu.vector_store %arg7[%142, %c0_38, %c0_39], %145 {strides = array<i32>} : memref<8x2x32xf32, #tpu.memory_space<vmem>>, vector<1x2x32xf32>,
    %c3_i32 = arith.constant 3 : i32
    %146 = arith.index_cast %c3_i32 : i32 to index
    %c0_40 = arith.constant 0 : index
    %c0_41 = arith.constant 0 : index
    %147 = vector.load %arg1[%146, %c0_40, %c0_41] : memref<8x2x144xf32, #tpu.memory_space<vmem>>, vector<1x2x144xf32>
    %148 = vector.shape_cast %147 : vector<1x2x144xf32> to vector<2x144xf32>
    %149 = arith.truncf %141 : vector<2x32xf32> to vector<2x32xbf16>
    %cst_42 = arith.constant dense<0.000000e+00> : vector<2x144xf32>
    %150 = tpu.matmul %149, %3, %cst_42 {dimension_numbers = #tpu.dot_dimension_numbers<[1], [0], [0], [1], [0, 0, 1, 1], [], []>} : vector<2x32xbf16>, vector<32x144xbf16>, vector<2x144xf32> -> vector<2x144xf32>
    %151 = arith.addf %148, %150 : vector<2x144xf32>
    %152 = vector.extract_strided_slice %151 {offsets = [0, 0], sizes = [2, 32], strides = [1, 1]} : vector<2x144xf32> to vector<2x32xf32>
    %153 = arith.negf %152 : vector<2x32xf32>
    %154 = math.exp %153 : vector<2x32xf32>
    %cst_43 = arith.constant 1.000000e+00 : f32
    %155 = vector.broadcast %cst_43 : f32 to vector<2x32xf32>
    %156 = arith.addf %155, %154 : vector<2x32xf32>
    %157 = arith.divf %155, %156 : vector<2x32xf32>
    %158 = vector.extract_strided_slice %151 {offsets = [0, 32], sizes = [2, 32], strides = [1, 1]} : vector<2x144xf32> to vector<2x32xf32>
    %159 = arith.negf %158 : vector<2x32xf32>
    %160 = math.exp %159 : vector<2x32xf32>
    %cst_44 = arith.constant 1.000000e+00 : f32
    %161 = vector.broadcast %cst_44 : f32 to vector<2x32xf32>
    %162 = arith.addf %161, %160 : vector<2x32xf32>
    %163 = arith.divf %161, %162 : vector<2x32xf32>
    %164 = vector.extract_strided_slice %151 {offsets = [0, 64], sizes = [2, 32], strides = [1, 1]} : vector<2x144xf32> to vector<2x32xf32>
    %165 = math.tanh %164 : vector<2x32xf32>
    %166 = vector.extract_strided_slice %151 {offsets = [0, 96], sizes = [2, 32], strides = [1, 1]} : vector<2x144xf32> to vector<2x32xf32>
    %167 = arith.negf %166 : vector<2x32xf32>
    %168 = math.exp %167 : vector<2x32xf32>
    %cst_45 = arith.constant 1.000000e+00 : f32
    %169 = vector.broadcast %cst_45 : f32 to vector<2x32xf32>
    %170 = arith.addf %169, %168 : vector<2x32xf32>
    %171 = arith.divf %169, %170 : vector<2x32xf32>
    %172 = vector.extract_strided_slice %151 {offsets = [0, 128], sizes = [2, 16], strides = [1, 1]} : vector<2x144xf32> to vector<2x16xf32>
    %173 = arith.negf %172 : vector<2x16xf32>
    %174 = math.exp %173 : vector<2x16xf32>
    %cst_46 = arith.constant 1.000000e+00 : f32
    %175 = vector.broadcast %cst_46 : f32 to vector<2x16xf32>
    %176 = arith.addf %175, %174 : vector<2x16xf32>
    %177 = arith.divf %175, %176 : vector<2x16xf32>
    %178 = arith.mulf %177, %132 : vector<2x16xf32>
    %179 = arith.mulf %163, %139 : vector<2x32xf32>
    %180 = arith.mulf %157, %165 : vector<2x32xf32>
    %181 = arith.addf %179, %180 : vector<2x32xf32>
    %182 = arith.truncf %178 : vector<2x16xf32> to vector<2x16xbf16>
    %cst_47 = arith.constant dense<0.000000e+00> : vector<2x32xf32>
    %183 = tpu.matmul %182, %4, %cst_47 {dimension_numbers = #tpu.dot_dimension_numbers<[1], [0], [0], [1], [0, 0, 1, 1], [], []>} : vector<2x16xbf16>, vector<16x32xbf16>, vector<2x32xf32> -> vector<2x32xf32>
    %184 = math.tanh %183 : vector<2x32xf32>
    %185 = arith.addf %181, %184 : vector<2x32xf32>
    %186 = math.tanh %185 : vector<2x32xf32>
    %187 = arith.mulf %171, %186 : vector<2x32xf32>
    %188 = arith.index_cast %c3_i32 : i32 to index
    %c0_48 = arith.constant 0 : index
    %c0_49 = arith.constant 0 : index
    %189 = vector.load %arg7[%188, %c0_48, %c0_49] : memref<8x2x32xf32, #tpu.memory_space<vmem>>, vector<1x2x32xf32>
    %190 = vector.shape_cast %189 : vector<1x2x32xf32> to vector<2x32xf32>
    %191 = vector.shape_cast %187 : vector<2x32xf32> to vector<1x2x32xf32>
    tpu.vector_store %arg7[%188, %c0_48, %c0_49], %191 {strides = array<i32>} : memref<8x2x32xf32, #tpu.memory_space<vmem>>, vector<1x2x32xf32>,
    %c4_i32 = arith.constant 4 : i32
    %192 = arith.index_cast %c4_i32 : i32 to index
    %c0_50 = arith.constant 0 : index
    %c0_51 = arith.constant 0 : index
    %193 = vector.load %arg1[%192, %c0_50, %c0_51] : memref<8x2x144xf32, #tpu.memory_space<vmem>>, vector<1x2x144xf32>
    %194 = vector.shape_cast %193 : vector<1x2x144xf32> to vector<2x144xf32>
    %195 = arith.truncf %187 : vector<2x32xf32> to vector<2x32xbf16>
    %cst_52 = arith.constant dense<0.000000e+00> : vector<2x144xf32>
    %196 = tpu.matmul %195, %3, %cst_52 {dimension_numbers = #tpu.dot_dimension_numbers<[1], [0], [0], [1], [0, 0, 1, 1], [], []>} : vector<2x32xbf16>, vector<32x144xbf16>, vector<2x144xf32> -> vector<2x144xf32>
    %197 = arith.addf %194, %196 : vector<2x144xf32>
    %198 = vector.extract_strided_slice %197 {offsets = [0, 0], sizes = [2, 32], strides = [1, 1]} : vector<2x144xf32> to vector<2x32xf32>
    %199 = arith.negf %198 : vector<2x32xf32>
    %200 = math.exp %199 : vector<2x32xf32>
    %cst_53 = arith.constant 1.000000e+00 : f32
    %201 = vector.broadcast %cst_53 : f32 to vector<2x32xf32>
    %202 = arith.addf %201, %200 : vector<2x32xf32>
    %203 = arith.divf %201, %202 : vector<2x32xf32>
    %204 = vector.extract_strided_slice %197 {offsets = [0, 32], sizes = [2, 32], strides = [1, 1]} : vector<2x144xf32> to vector<2x32xf32>
    %205 = arith.negf %204 : vector<2x32xf32>
    %206 = math.exp %205 : vector<2x32xf32>
    %cst_54 = arith.constant 1.000000e+00 : f32
    %207 = vector.broadcast %cst_54 : f32 to vector<2x32xf32>
    %208 = arith.addf %207, %206 : vector<2x32xf32>
    %209 = arith.divf %207, %208 : vector<2x32xf32>
    %210 = vector.extract_strided_slice %197 {offsets = [0, 64], sizes = [2, 32], strides = [1, 1]} : vector<2x144xf32> to vector<2x32xf32>
    %211 = math.tanh %210 : vector<2x32xf32>
    %212 = vector.extract_strided_slice %197 {offsets = [0, 96], sizes = [2, 32], strides = [1, 1]} : vector<2x144xf32> to vector<2x32xf32>
    %213 = arith.negf %212 : vector<2x32xf32>
    %214 = math.exp %213 : vector<2x32xf32>
    %cst_55 = arith.constant 1.000000e+00 : f32
    %215 = vector.broadcast %cst_55 : f32 to vector<2x32xf32>
    %216 = arith.addf %215, %214 : vector<2x32xf32>
    %217 = arith.divf %215, %216 : vector<2x32xf32>
    %218 = vector.extract_strided_slice %197 {offsets = [0, 128], sizes = [2, 16], strides = [1, 1]} : vector<2x144xf32> to vector<2x16xf32>
    %219 = arith.negf %218 : vector<2x16xf32>
    %220 = math.exp %219 : vector<2x16xf32>
    %cst_56 = arith.constant 1.000000e+00 : f32
    %221 = vector.broadcast %cst_56 : f32 to vector<2x16xf32>
    %222 = arith.addf %221, %220 : vector<2x16xf32>
    %223 = arith.divf %221, %222 : vector<2x16xf32>
    %224 = arith.mulf %223, %178 : vector<2x16xf32>
    %225 = arith.mulf %209, %185 : vector<2x32xf32>
    %226 = arith.mulf %203, %211 : vector<2x32xf32>
    %227 = arith.addf %225, %226 : vector<2x32xf32>
    %228 = arith.truncf %224 : vector<2x16xf32> to vector<2x16xbf16>
    %cst_57 = arith.constant dense<0.000000e+00> : vector<2x32xf32>
    %229 = tpu.matmul %228, %4, %cst_57 {dimension_numbers = #tpu.dot_dimension_numbers<[1], [0], [0], [1], [0, 0, 1, 1], [], []>} : vector<2x16xbf16>, vector<16x32xbf16>, vector<2x32xf32> -> vector<2x32xf32>
    %230 = math.tanh %229 : vector<2x32xf32>
    %231 = arith.addf %227, %230 : vector<2x32xf32>
    %232 = math.tanh %231 : vector<2x32xf32>
    %233 = arith.mulf %217, %232 : vector<2x32xf32>
    %234 = arith.index_cast %c4_i32 : i32 to index
    %c0_58 = arith.constant 0 : index
    %c0_59 = arith.constant 0 : index
    %235 = vector.load %arg7[%234, %c0_58, %c0_59] : memref<8x2x32xf32, #tpu.memory_space<vmem>>, vector<1x2x32xf32>
    %236 = vector.shape_cast %235 : vector<1x2x32xf32> to vector<2x32xf32>
    %237 = vector.shape_cast %233 : vector<2x32xf32> to vector<1x2x32xf32>
    tpu.vector_store %arg7[%234, %c0_58, %c0_59], %237 {strides = array<i32>} : memref<8x2x32xf32, #tpu.memory_space<vmem>>, vector<1x2x32xf32>,
    %c5_i32 = arith.constant 5 : i32
    %238 = arith.index_cast %c5_i32 : i32 to index
    %c0_60 = arith.constant 0 : index
    %c0_61 = arith.constant 0 : index
    %239 = vector.load %arg1[%238, %c0_60, %c0_61] : memref<8x2x144xf32, #tpu.memory_space<vmem>>, vector<1x2x144xf32>
    %240 = vector.shape_cast %239 : vector<1x2x144xf32> to vector<2x144xf32>
    %241 = arith.truncf %233 : vector<2x32xf32> to vector<2x32xbf16>
    %cst_62 = arith.constant dense<0.000000e+00> : vector<2x144xf32>
    %242 = tpu.matmul %241, %3, %cst_62 {dimension_numbers = #tpu.dot_dimension_numbers<[1], [0], [0], [1], [0, 0, 1, 1], [], []>} : vector<2x32xbf16>, vector<32x144xbf16>, vector<2x144xf32> -> vector<2x144xf32>
    %243 = arith.addf %240, %242 : vector<2x144xf32>
    %244 = vector.extract_strided_slice %243 {offsets = [0, 0], sizes = [2, 32], strides = [1, 1]} : vector<2x144xf32> to vector<2x32xf32>
    %245 = arith.negf %244 : vector<2x32xf32>
    %246 = math.exp %245 : vector<2x32xf32>
    %cst_63 = arith.constant 1.000000e+00 : f32
    %247 = vector.broadcast %cst_63 : f32 to vector<2x32xf32>
    %248 = arith.addf %247, %246 : vector<2x32xf32>
    %249 = arith.divf %247, %248 : vector<2x32xf32>
    %250 = vector.extract_strided_slice %243 {offsets = [0, 32], sizes = [2, 32], strides = [1, 1]} : vector<2x144xf32> to vector<2x32xf32>
    %251 = arith.negf %250 : vector<2x32xf32>
    %252 = math.exp %251 : vector<2x32xf32>
    %cst_64 = arith.constant 1.000000e+00 : f32
    %253 = vector.broadcast %cst_64 : f32 to vector<2x32xf32>
    %254 = arith.addf %253, %252 : vector<2x32xf32>
    %255 = arith.divf %253, %254 : vector<2x32xf32>
    %256 = vector.extract_strided_slice %243 {offsets = [0, 64], sizes = [2, 32], strides = [1, 1]} : vector<2x144xf32> to vector<2x32xf32>
    %257 = math.tanh %256 : vector<2x32xf32>
    %258 = vector.extract_strided_slice %243 {offsets = [0, 96], sizes = [2, 32], strides = [1, 1]} : vector<2x144xf32> to vector<2x32xf32>
    %259 = arith.negf %258 : vector<2x32xf32>
    %260 = math.exp %259 : vector<2x32xf32>
    %cst_65 = arith.constant 1.000000e+00 : f32
    %261 = vector.broadcast %cst_65 : f32 to vector<2x32xf32>
    %262 = arith.addf %261, %260 : vector<2x32xf32>
    %263 = arith.divf %261, %262 : vector<2x32xf32>
    %264 = vector.extract_strided_slice %243 {offsets = [0, 128], sizes = [2, 16], strides = [1, 1]} : vector<2x144xf32> to vector<2x16xf32>
    %265 = arith.negf %264 : vector<2x16xf32>
    %266 = math.exp %265 : vector<2x16xf32>
    %cst_66 = arith.constant 1.000000e+00 : f32
    %267 = vector.broadcast %cst_66 : f32 to vector<2x16xf32>
    %268 = arith.addf %267, %266 : vector<2x16xf32>
    %269 = arith.divf %267, %268 : vector<2x16xf32>
    %270 = arith.mulf %269, %224 : vector<2x16xf32>
    %271 = arith.mulf %255, %231 : vector<2x32xf32>
    %272 = arith.mulf %249, %257 : vector<2x32xf32>
    %273 = arith.addf %271, %272 : vector<2x32xf32>
    %274 = arith.truncf %270 : vector<2x16xf32> to vector<2x16xbf16>
    %cst_67 = arith.constant dense<0.000000e+00> : vector<2x32xf32>
    %275 = tpu.matmul %274, %4, %cst_67 {dimension_numbers = #tpu.dot_dimension_numbers<[1], [0], [0], [1], [0, 0, 1, 1], [], []>} : vector<2x16xbf16>, vector<16x32xbf16>, vector<2x32xf32> -> vector<2x32xf32>
    %276 = math.tanh %275 : vector<2x32xf32>
    %277 = arith.addf %273, %276 : vector<2x32xf32>
    %278 = math.tanh %277 : vector<2x32xf32>
    %279 = arith.mulf %263, %278 : vector<2x32xf32>
    %280 = arith.index_cast %c5_i32 : i32 to index
    %c0_68 = arith.constant 0 : index
    %c0_69 = arith.constant 0 : index
    %281 = vector.load %arg7[%280, %c0_68, %c0_69] : memref<8x2x32xf32, #tpu.memory_space<vmem>>, vector<1x2x32xf32>
    %282 = vector.shape_cast %281 : vector<1x2x32xf32> to vector<2x32xf32>
    %283 = vector.shape_cast %279 : vector<2x32xf32> to vector<1x2x32xf32>
    tpu.vector_store %arg7[%280, %c0_68, %c0_69], %283 {strides = array<i32>} : memref<8x2x32xf32, #tpu.memory_space<vmem>>, vector<1x2x32xf32>,
    %c6_i32 = arith.constant 6 : i32
    %284 = arith.index_cast %c6_i32 : i32 to index
    %c0_70 = arith.constant 0 : index
    %c0_71 = arith.constant 0 : index
    %285 = vector.load %arg1[%284, %c0_70, %c0_71] : memref<8x2x144xf32, #tpu.memory_space<vmem>>, vector<1x2x144xf32>
    %286 = vector.shape_cast %285 : vector<1x2x144xf32> to vector<2x144xf32>
    %287 = arith.truncf %279 : vector<2x32xf32> to vector<2x32xbf16>
    %cst_72 = arith.constant dense<0.000000e+00> : vector<2x144xf32>
    %288 = tpu.matmul %287, %3, %cst_72 {dimension_numbers = #tpu.dot_dimension_numbers<[1], [0], [0], [1], [0, 0, 1, 1], [], []>} : vector<2x32xbf16>, vector<32x144xbf16>, vector<2x144xf32> -> vector<2x144xf32>
    %289 = arith.addf %286, %288 : vector<2x144xf32>
    %290 = vector.extract_strided_slice %289 {offsets = [0, 0], sizes = [2, 32], strides = [1, 1]} : vector<2x144xf32> to vector<2x32xf32>
    %291 = arith.negf %290 : vector<2x32xf32>
    %292 = math.exp %291 : vector<2x32xf32>
    %cst_73 = arith.constant 1.000000e+00 : f32
    %293 = vector.broadcast %cst_73 : f32 to vector<2x32xf32>
    %294 = arith.addf %293, %292 : vector<2x32xf32>
    %295 = arith.divf %293, %294 : vector<2x32xf32>
    %296 = vector.extract_strided_slice %289 {offsets = [0, 32], sizes = [2, 32], strides = [1, 1]} : vector<2x144xf32> to vector<2x32xf32>
    %297 = arith.negf %296 : vector<2x32xf32>
    %298 = math.exp %297 : vector<2x32xf32>
    %cst_74 = arith.constant 1.000000e+00 : f32
    %299 = vector.broadcast %cst_74 : f32 to vector<2x32xf32>
    %300 = arith.addf %299, %298 : vector<2x32xf32>
    %301 = arith.divf %299, %300 : vector<2x32xf32>
    %302 = vector.extract_strided_slice %289 {offsets = [0, 64], sizes = [2, 32], strides = [1, 1]} : vector<2x144xf32> to vector<2x32xf32>
    %303 = math.tanh %302 : vector<2x32xf32>
    %304 = vector.extract_strided_slice %289 {offsets = [0, 96], sizes = [2, 32], strides = [1, 1]} : vector<2x144xf32> to vector<2x32xf32>
    %305 = arith.negf %304 : vector<2x32xf32>
    %306 = math.exp %305 : vector<2x32xf32>
    %cst_75 = arith.constant 1.000000e+00 : f32
    %307 = vector.broadcast %cst_75 : f32 to vector<2x32xf32>
    %308 = arith.addf %307, %306 : vector<2x32xf32>
    %309 = arith.divf %307, %308 : vector<2x32xf32>
    %310 = vector.extract_strided_slice %289 {offsets = [0, 128], sizes = [2, 16], strides = [1, 1]} : vector<2x144xf32> to vector<2x16xf32>
    %311 = arith.negf %310 : vector<2x16xf32>
    %312 = math.exp %311 : vector<2x16xf32>
    %cst_76 = arith.constant 1.000000e+00 : f32
    %313 = vector.broadcast %cst_76 : f32 to vector<2x16xf32>
    %314 = arith.addf %313, %312 : vector<2x16xf32>
    %315 = arith.divf %313, %314 : vector<2x16xf32>
    %316 = arith.mulf %315, %270 : vector<2x16xf32>
    %317 = arith.mulf %301, %277 : vector<2x32xf32>
    %318 = arith.mulf %295, %303 : vector<2x32xf32>
    %319 = arith.addf %317, %318 : vector<2x32xf32>
    %320 = arith.truncf %316 : vector<2x16xf32> to vector<2x16xbf16>
    %cst_77 = arith.constant dense<0.000000e+00> : vector<2x32xf32>
    %321 = tpu.matmul %320, %4, %cst_77 {dimension_numbers = #tpu.dot_dimension_numbers<[1], [0], [0], [1], [0, 0, 1, 1], [], []>} : vector<2x16xbf16>, vector<16x32xbf16>, vector<2x32xf32> -> vector<2x32xf32>
    %322 = math.tanh %321 : vector<2x32xf32>
    %323 = arith.addf %319, %322 : vector<2x32xf32>
    %324 = math.tanh %323 : vector<2x32xf32>
    %325 = arith.mulf %309, %324 : vector<2x32xf32>
    %326 = arith.index_cast %c6_i32 : i32 to index
    %c0_78 = arith.constant 0 : index
    %c0_79 = arith.constant 0 : index
    %327 = vector.load %arg7[%326, %c0_78, %c0_79] : memref<8x2x32xf32, #tpu.memory_space<vmem>>, vector<1x2x32xf32>
    %328 = vector.shape_cast %327 : vector<1x2x32xf32> to vector<2x32xf32>
    %329 = vector.shape_cast %325 : vector<2x32xf32> to vector<1x2x32xf32>
    tpu.vector_store %arg7[%326, %c0_78, %c0_79], %329 {strides = array<i32>} : memref<8x2x32xf32, #tpu.memory_space<vmem>>, vector<1x2x32xf32>,
    %c7_i32 = arith.constant 7 : i32
    %330 = arith.index_cast %c7_i32 : i32 to index
    %c0_80 = arith.constant 0 : index
    %c0_81 = arith.constant 0 : index
    %331 = vector.load %arg1[%330, %c0_80, %c0_81] : memref<8x2x144xf32, #tpu.memory_space<vmem>>, vector<1x2x144xf32>
    %332 = vector.shape_cast %331 : vector<1x2x144xf32> to vector<2x144xf32>
    %333 = arith.truncf %325 : vector<2x32xf32> to vector<2x32xbf16>
    %cst_82 = arith.constant dense<0.000000e+00> : vector<2x144xf32>
    %334 = tpu.matmul %333, %3, %cst_82 {dimension_numbers = #tpu.dot_dimension_numbers<[1], [0], [0], [1], [0, 0, 1, 1], [], []>} : vector<2x32xbf16>, vector<32x144xbf16>, vector<2x144xf32> -> vector<2x144xf32>
    %335 = arith.addf %332, %334 : vector<2x144xf32>
    %336 = vector.extract_strided_slice %335 {offsets = [0, 0], sizes = [2, 32], strides = [1, 1]} : vector<2x144xf32> to vector<2x32xf32>
    %337 = arith.negf %336 : vector<2x32xf32>
    %338 = math.exp %337 : vector<2x32xf32>
    %cst_83 = arith.constant 1.000000e+00 : f32
    %339 = vector.broadcast %cst_83 : f32 to vector<2x32xf32>
    %340 = arith.addf %339, %338 : vector<2x32xf32>
    %341 = arith.divf %339, %340 : vector<2x32xf32>
    %342 = vector.extract_strided_slice %335 {offsets = [0, 32], sizes = [2, 32], strides = [1, 1]} : vector<2x144xf32> to vector<2x32xf32>
    %343 = arith.negf %342 : vector<2x32xf32>
    %344 = math.exp %343 : vector<2x32xf32>
    %cst_84 = arith.constant 1.000000e+00 : f32
    %345 = vector.broadcast %cst_84 : f32 to vector<2x32xf32>
    %346 = arith.addf %345, %344 : vector<2x32xf32>
    %347 = arith.divf %345, %346 : vector<2x32xf32>
    %348 = vector.extract_strided_slice %335 {offsets = [0, 64], sizes = [2, 32], strides = [1, 1]} : vector<2x144xf32> to vector<2x32xf32>
    %349 = math.tanh %348 : vector<2x32xf32>
    %350 = vector.extract_strided_slice %335 {offsets = [0, 96], sizes = [2, 32], strides = [1, 1]} : vector<2x144xf32> to vector<2x32xf32>
    %351 = arith.negf %350 : vector<2x32xf32>
    %352 = math.exp %351 : vector<2x32xf32>
    %cst_85 = arith.constant 1.000000e+00 : f32
    %353 = vector.broadcast %cst_85 : f32 to vector<2x32xf32>
    %354 = arith.addf %353, %352 : vector<2x32xf32>
    %355 = arith.divf %353, %354 : vector<2x32xf32>
    %356 = vector.extract_strided_slice %335 {offsets = [0, 128], sizes = [2, 16], strides = [1, 1]} : vector<2x144xf32> to vector<2x16xf32>
    %357 = arith.negf %356 : vector<2x16xf32>
    %358 = math.exp %357 : vector<2x16xf32>
    %cst_86 = arith.constant 1.000000e+00 : f32
    %359 = vector.broadcast %cst_86 : f32 to vector<2x16xf32>
    %360 = arith.addf %359, %358 : vector<2x16xf32>
    %361 = arith.divf %359, %360 : vector<2x16xf32>
    %362 = arith.mulf %361, %316 : vector<2x16xf32>
    %363 = arith.mulf %347, %323 : vector<2x32xf32>
    %364 = arith.mulf %341, %349 : vector<2x32xf32>
    %365 = arith.addf %363, %364 : vector<2x32xf32>
    %366 = arith.truncf %362 : vector<2x16xf32> to vector<2x16xbf16>
    %cst_87 = arith.constant dense<0.000000e+00> : vector<2x32xf32>
    %367 = tpu.matmul %366, %4, %cst_87 {dimension_numbers = #tpu.dot_dimension_numbers<[1], [0], [0], [1], [0, 0, 1, 1], [], []>} : vector<2x16xbf16>, vector<16x32xbf16>, vector<2x32xf32> -> vector<2x32xf32>
    %368 = math.tanh %367 : vector<2x32xf32>
    %369 = arith.addf %365, %368 : vector<2x32xf32>
    %370 = math.tanh %369 : vector<2x32xf32>
    %371 = arith.mulf %355, %370 : vector<2x32xf32>
    %372 = arith.index_cast %c7_i32 : i32 to index
    %c0_88 = arith.constant 0 : index
    %c0_89 = arith.constant 0 : index
    %373 = vector.load %arg7[%372, %c0_88, %c0_89] : memref<8x2x32xf32, #tpu.memory_space<vmem>>, vector<1x2x32xf32>
    %374 = vector.shape_cast %373 : vector<1x2x32xf32> to vector<2x32xf32>
    %375 = vector.shape_cast %371 : vector<2x32xf32> to vector<1x2x32xf32>
    tpu.vector_store %arg7[%372, %c0_88, %c0_89], %375 {strides = array<i32>} : memref<8x2x32xf32, #tpu.memory_space<vmem>>, vector<1x2x32xf32>,
    %c8_i32 = arith.constant 8 : i32
    %c0_90 = arith.constant 0 : index
    %c0_91 = arith.constant 0 : index
    %376 = vector.load %arg8[%c0_90, %c0_91] : memref<2x32xf32, #tpu.memory_space<vmem>>, vector<2x32xf32>
    tpu.vector_store %arg8[%c0_90, %c0_91], %371 {strides = array<i32>} : memref<2x32xf32, #tpu.memory_space<vmem>>, vector<2x32xf32>,
    %c0_92 = arith.constant 0 : index
    %c0_93 = arith.constant 0 : index
    %377 = vector.load %arg9[%c0_92, %c0_93] : memref<2x32xf32, #tpu.memory_space<vmem>>, vector<2x32xf32>
    tpu.vector_store %arg9[%c0_92, %c0_93], %369 {strides = array<i32>} : memref<2x32xf32, #tpu.memory_space<vmem>>, vector<2x32xf32>,
    %c0_94 = arith.constant 0 : index
    %c0_95 = arith.constant 0 : index
    %378 = vector.load %arg10[%c0_94, %c0_95] : memref<2x16xf32, #tpu.memory_space<vmem>>, vector<2x16xf32>
    tpu.vector_store %arg10[%c0_94, %c0_95], %362 {strides = array<i32>} : memref<2x16xf32, #tpu.memory_space<vmem>>, vector<2x16xf32>,
    return
  }
  func.func @transform_0(%arg0: i32) -> (i32, i32, i32) {
    %c0_i32 = arith.constant 0 : i32
    %c0_i32_0 = arith.constant 0 : i32
    %c0_i32_1 = arith.constant 0 : i32
    return %arg0, %c0_i32, %c0_i32_0 : i32, i32, i32
  }
  func.func @transform_1(%arg0: i32) -> (i32, i32) {
    %c0_i32 = arith.constant 0 : i32
    %c0_i32_0 = arith.constant 0 : i32
    %c0_i32_1 = arith.constant 0 : i32
    return %c0_i32, %c0_i32_0 : i32, i32
  }
  func.func @transform_2(%arg0: i32) -> (i32, i32) {
    %c0_i32 = arith.constant 0 : i32
    %c0_i32_0 = arith.constant 0 : i32
    %c0_i32_1 = arith.constant 0 : i32
    return %c0_i32, %c0_i32_0 : i32, i32
  }
  func.func @transform_3(%arg0: i32) -> (i32, i32) {
    %c0_i32 = arith.constant 0 : i32
    %c0_i32_0 = arith.constant 0 : i32
    %c0_i32_1 = arith.constant 0 : i32
    return %c0_i32, %c0_i32_0 : i32, i32
  }
  func.func @transform_4(%arg0: i32) -> (i32, i32) {
    %c0_i32 = arith.constant 0 : i32
    %c0_i32_0 = arith.constant 0 : i32
    %c0_i32_1 = arith.constant 0 : i32
    return %c0_i32, %c0_i32_0 : i32, i32
  }
  func.func @transform_5(%arg0: i32) -> (i32, i32) {
    %c0_i32 = arith.constant 0 : i32
    %c0_i32_0 = arith.constant 0 : i32
    %c0_i32_1 = arith.constant 0 : i32
    return %c0_i32, %c0_i32_0 : i32, i32
  }
  func.func @transform_6(%arg0: i32) -> (i32, i32, i32) {
    %c0_i32 = arith.constant 0 : i32
    %c0_i32_0 = arith.constant 0 : i32
    %c0_i32_1 = arith.constant 0 : i32
    return %arg0, %c0_i32, %c0_i32_0 : i32, i32, i32
  }
  func.func @transform_7(%arg0: i32) -> (i32, i32) {
    %c0_i32 = arith.constant 0 : i32
    %c0_i32_0 = arith.constant 0 : i32
    %c0_i32_1 = arith.constant 0 : i32
    return %c0_i32, %c0_i32_0 : i32, i32
  }
  func.func @transform_8(%arg0: i32) -> (i32, i32) {
    %c0_i32 = arith.constant 0 : i32
    %c0_i32_0 = arith.constant 0 : i32
    %c0_i32_1 = arith.constant 0 : i32
    return %c0_i32, %c0_i32_0 : i32, i32
  }
  func.func @transform_9(%arg0: i32) -> (i32, i32) {
    %c0_i32 = arith.constant 0 : i32
    %c0_i32_0 = arith.constant 0 : i32
    %c0_i32_1 = arith.constant 0 : i32
    return %c0_i32, %c0_i32_0 : i32, i32
  }
}

</mosaic_0001>

<llo_original>
// kernel: cs_lstm_forward.5
$region0: #{cs_lstm_forward.5}
  #allocation0 [shape = 'u32[]', space=smem, size = 0x4, offset = 0x4, fixed_abs, tag = 'smem constant byte address 0x4 - core index']
  #allocation1 [shape = 'u32[144,128]{1,0:T(1,128)}', space=vmem, size = 0x12000, scoped, tag = 'internal scratch']
  %s0 = inlined_call_operand.vmem [shape: bf16[16,32], index: 0, kind: input, shape index: {}]
  %s1 = inlined_call_operand.vmem [shape: bf16[32,144], index: 1, kind: input, shape index: {}]
  %s2 = inlined_call_operand.vmem [shape: f32[1,144], index: 2, kind: input, shape index: {}]
  %s3 = inlined_call_operand.vmem [shape: f32[16,144], index: 3, kind: output, shape index: {}]
  %s4 = sld [smem:[#allocation0]]
  $region22: #{cs_lstm_forward.5} parent=0
    _
  %s6 = ssub.s32 1, %s4
  %s7 = scalar_select 0, %s6, %s4
  // Predicated region
  $region2: #{cs_lstm_forward.5} parent=0 // pred_check
    _
  $region3: #{cs_lstm_forward.5} parent=0 // pred_check_branch
    %9 = sbr.rel (0) target = $region5
  $region4: #{cs_lstm_forward.5} parent=0 // pred_region
    _
  $region5: #{cs_lstm_forward.5} parent=0 // pred_fallthru
    _
  // Predicated region
  $region6: #{cs_lstm_forward.5} parent=0 // pred_check
    _
  $region7: #{cs_lstm_forward.5} parent=0 // pred_check_branch
    %11 = sbr.rel (0) target = $region9
  $region8: #{cs_lstm_forward.5} parent=0 // pred_region
    _
  $region9: #{cs_lstm_forward.5} parent=0 // pred_fallthru
    _
  // Predicated region
  $region10: #{cs_lstm_forward.5} parent=0 // pred_check
    _
  $region11: #{cs_lstm_forward.5} parent=0 // pred_check_branch
    %13 = sbr.rel (0) target = $region13
  $region12: #{cs_lstm_forward.5} parent=0 // pred_region
    _
  $region13: #{cs_lstm_forward.5} parent=0 // pred_fallthru
    _
  %v15 = vld [vmem:[%s0] sm:$0xf]
  %v16 = vld [vmem:[%s0 + $0x4] sm:$0xf]
  %v17 = vld [vmem:[%s1] sm:$0xff]
  %v18 = vld [vmem:[%s1 + $0x8] sm:$0xff]
  %v19 = vld [vmem:[%s1 + $0x10] sm:$0xff]
  %v20 = vld [vmem:[%s1 + $0x18] sm:$0xff]
  %v21 = vld [vmem:[%s2] sm:$0x3]
  %v23 = vlaneseq
  %v24 = vshrl.u32 %v23, 7
  %v25 = vsub.s32 0, %v24
  %v26 = vrot.slane %v21, %v25
  %v27 = vlaneseq
  %v28 = vshrl.u32 %v27, 7
  %v29 = vsub.s32 1, %v28
  %v30 = vrot.slane %v21, %v29
  %v35 = vunpack.c.l.b16 %v15
  %v36 = vunpack.c.l.b16 %v16
  %v37 = vpack.c.b16 %v36, %v35
  %v42 = vunpack.c.l.b16 %v17
  %v43 = vunpack.c.h.b16 %v17
  %v44 = vunpack.c.l.b16 %v18
  %v45 = vunpack.c.h.b16 %v18
  %v46 = vunpack.c.l.b16 %v19
  %v47 = vunpack.c.h.b16 %v19
  %v48 = vunpack.c.l.b16 %v20
  %v49 = vunpack.c.h.b16 %v20
  %v50 = vpack.c.b16 %v44, %v42
  %v51 = vpack.c.b16 %v45, %v43
  %v52 = vpack.c.b16 %v48, %v46
  %v53 = vpack.c.b16 %v49, %v47
  %vm58 = vcmask 261120
  %v60 = vsel %vm58, %v37, 0
  %62 = vmatprep.subr.bf16.mxu0 0
  %63 = vmatpush1.bf16.msra.mxu0 0
  %64 = vmatprep.subr.bf16.mxu0 0
  %65 = vmatpush1.bf16.msra.mxu0 0
  %66 = vmatprep.subr.bf16.mxu0 0
  %67 = vmatpush1.bf16.msra.mxu0 0
  %68 = vmatprep.subr.bf16.mxu0 0
  %69 = vmatpush1.bf16.msra.mxu0 0
  %70 = vmatprep.subr.bf16.mxu0 0
  %71 = vmatpush1.bf16.msra.mxu0 0
  %72 = vmatprep.subr.bf16.mxu0 0
  %73 = vmatpush1.bf16.msra.mxu0 0
  %74 = vmatprep.subr.bf16.mxu0 %v53
  %75 = vmatpush1.bf16.msra.mxu0 %v52
  %76 = vmatprep.subr.bf16.mxu0 %v51
  %77 = vmatpush1.bf16.msra.mxu0 %v50
  %78 = vmatprep.subr.bf16.mxu0 0
  %79 = vmatpush2.bf16.msra.mxu0 0
  %80 = vmatprep.subr.bf16.mxu0 0
  %81 = vmatpush2.bf16.msra.mxu0 0
  %82 = vmatprep.subr.bf16.mxu0 0
  %83 = vmatpush2.bf16.msra.mxu0 0
  %84 = vmatprep.subr.bf16.mxu0 0
  %85 = vmatpush2.bf16.msra.mxu0 0
  %86 = vmatprep.subr.bf16.mxu0 0
  %87 = vmatpush2.bf16.msra.mxu0 0
  %88 = vmatprep.subr.bf16.mxu0 0
  %89 = vmatpush2.bf16.msra.mxu0 0
  %90 = vmatprep.subr.bf16.mxu0 0
  %91 = vmatpush2.bf16.msra.mxu0 0
  %92 = vmatprep.subr.bf16.mxu0 0
  %93 = vmatpush2.bf16.msra.mxu0 0
  %94 = vmatprep.mubr.bf16.mxu0 0
  %95 = vmatmul.mubr.bf16.gmra.mxu0 %v60
  %v96 = vpop.f32.mrf.mxu0
  %v97 = vadd.f32 %v26, %v96
  %v98 = vpop.f32.mrf.mxu0
  %v99 = vadd.f32 %v30, %v98
  %v100 = vpop.f32.mrf.mxu0
  %v101 = vadd.f32 %v26, %v100
  %v102 = vpop.f32.mrf.mxu0
  %v103 = vadd.f32 %v30, %v102
  %104 = vdwg.mxu0
  %105 = vst [vmem:[%s3] sm:$0xff] %v97
  %vm106 = vcmask 130048
  %107 = vst.msk [vmem:[%s3 + $0x8] sm:$0xff] %vm106, %v99
  %108 = vst [vmem:[%s3 + $0x10] sm:$0xff] %v101
  %109 = vst.msk [vmem:[%s3 + $0x18] sm:$0xff] %vm106, %v103
  // Predicated region
  $region14: #{cs_lstm_forward.5} parent=0 // pred_check
    _
  $region15: #{cs_lstm_forward.5} parent=0 // pred_check_branch
    %111 = sbr.rel (0) target = $region17
  $region16: #{cs_lstm_forward.5} parent=0 // pred_region
    _
  $region17: #{cs_lstm_forward.5} parent=0 // pred_fallthru
    _
  // Predicated region
  $region18: #{cs_lstm_forward.5} parent=0 // pred_check
    _
  $region19: #{cs_lstm_forward.5} parent=0 // pred_check_branch
    %113 = sbr.rel (0) target = $region21
  $region20: #{cs_lstm_forward.5} parent=0 // pred_region
    _
  $region21: #{cs_lstm_forward.5} parent=0 // pred_fallthru
    _

// kernel: cs_lstm_forward.9
$region0: #{cs_lstm_forward.9}
  #allocation0 [shape = 'u32[]', space=smem, size = 0x4, offset = 0x4, fixed_abs, tag = 'smem constant byte address 0x4 - core index']
  #allocation1 [shape = 'u32[144,128]{1,0:T(1,128)}', space=vmem, size = 0x12000, scoped, tag = 'internal scratch']
  %s0 = inlined_call_operand.vmem [shape: bf16[16,32], index: 0, kind: input, shape index: {}]
  %s1 = inlined_call_operand.vmem [shape: bf16[32,50], index: 1, kind: input, shape index: {}]
  %s2 = inlined_call_operand.vmem [shape: f32[1,50], index: 2, kind: input, shape index: {}]
  %s3 = inlined_call_operand.hbm [shape: f32[16,50], index: 3, kind: output, shape index: {}]
  %s4 = sld [smem:[#allocation0]]
  $region22: #{cs_lstm_forward.9} parent=0
    _
  %s6 = ssub.s32 1, %s4
  %s7 = scalar_select 0, %s6, %s4
  $region1: #{cs_lstm_forward.9} parent=0
    #allocation2 [shape = 'u8[8192]{0}', space=vmem, size = 0x2000, scoped, tag = 'output window, operand 0, single buffered']
    #allocation3 [shape = 's32[1]{0}', space=sflag, size = 0x4, scoped, tag = 'scoped memory for cs_lstm_forward.9']
    %8 = vsyncpa [#allocation3], 0
    // Predicated region
    $region2: #{cs_lstm_forward.9} parent=1 // pred_check
      _
    $region3: #{cs_lstm_forward.9} parent=1 // pred_check_branch
      %10 = sbr.rel (0) target = $region5
    $region4: #{cs_lstm_forward.9} parent=1 // pred_region
      _
    $region5: #{cs_lstm_forward.9} parent=1 // pred_fallthru
      _
    // Predicated region
    $region6: #{cs_lstm_forward.9} parent=1 // pred_check
      _
    $region7: #{cs_lstm_forward.9} parent=1 // pred_check_branch
      %12 = sbr.rel (0) target = $region9
    $region8: #{cs_lstm_forward.9} parent=1 // pred_region
      _
    $region9: #{cs_lstm_forward.9} parent=1 // pred_fallthru
      _
    // Predicated region
    $region10: #{cs_lstm_forward.9} parent=1 // pred_check
      _
    $region11: #{cs_lstm_forward.9} parent=1 // pred_check_branch
      %14 = sbr.rel (0) target = $region13
    $region12: #{cs_lstm_forward.9} parent=1 // pred_region
      _
    $region13: #{cs_lstm_forward.9} parent=1 // pred_fallthru
      _
    %v16 = vld [vmem:[%s0] sm:$0xf]
    %v17 = vld [vmem:[%s0 + $0x4] sm:$0xf]
    %v18 = vld [vmem:[%s1] sm:$0xf]
    %v19 = vld [vmem:[%s1 + $0x4] sm:$0xf]
    %v20 = vld [vmem:[%s1 + $0x8] sm:$0xf]
    %v21 = vld [vmem:[%s1 + $0xc] sm:$0xf]
    %v22 = vld [vmem:[%s2] sm:$0x1]
    %v24 = vlaneseq
    %v25 = vshrl.u32 %v24, 7
    %v26 = vsub.s32 0, %v25
    %v27 = vrot.slane %v22, %v26
    %v31 = vunpack.c.l.b16 %v16
    %v32 = vunpack.c.l.b16 %v17
    %v33 = vpack.c.b16 %v32, %v31
    %v38 = vunpack.c.l.b16 %v18
    %v39 = vunpack.c.l.b16 %v19
    %v40 = vunpack.c.l.b16 %v20
    %v41 = vunpack.c.l.b16 %v21
    %v42 = vpack.c.b16 %v39, %v38
    %v43 = vpack.c.b16 %v41, %v40
    %vm46 = vcmask 261120
    %v48 = vsel %vm46, %v33, 0
    %50 = vmatprep.subr.bf16.mxu0 0
    %51 = vmatpush1.bf16.msra.mxu0 0
    %52 = vmatprep.subr.bf16.mxu0 0
    %53 = vmatpush1.bf16.msra.mxu0 0
    %54 = vmatprep.subr.bf16.mxu0 0
    %55 = vmatpush1.bf16.msra.mxu0 0
    %56 = vmatprep.subr.bf16.mxu0 0
    %57 = vmatpush1.bf16.msra.mxu0 0
    %58 = vmatprep.subr.bf16.mxu0 0
    %59 = vmatpush1.bf16.msra.mxu0 0
    %60 = vmatprep.subr.bf16.mxu0 0
    %61 = vmatpush1.bf16.msra.mxu0 0
    %62 = vmatprep.subr.bf16.mxu0 0
    %63 = vmatpush1.bf16.msra.mxu0 %v43
    %64 = vmatprep.subr.bf16.mxu0 0
    %65 = vmatpush1.bf16.msra.mxu0 %v42
    %66 = vmatprep.subr.bf16.mxu0 0
    %67 = vmatpush2.bf16.msra.mxu0 0
    %68 = vmatprep.subr.bf16.mxu0 0
    %69 = vmatpush2.bf16.msra.mxu0 0
    %70 = vmatprep.subr.bf16.mxu0 0
    %71 = vmatpush2.bf16.msra.mxu0 0
    %72 = vmatprep.subr.bf16.mxu0 0
    %73 = vmatpush2.bf16.msra.mxu0 0
    %74 = vmatprep.subr.bf16.mxu0 0
    %75 = vmatpush2.bf16.msra.mxu0 0
    %76 = vmatprep.subr.bf16.mxu0 0
    %77 = vmatpush2.bf16.msra.mxu0 0
    %78 = vmatprep.subr.bf16.mxu0 0
    %79 = vmatpush2.bf16.msra.mxu0 0
    %80 = vmatprep.subr.bf16.mxu0 0
    %81 = vmatpush2.bf16.msra.mxu0 0
    %82 = vmatprep.mubr.bf16.mxu0 0
    %83 = vmatmul.mubr.bf16.gmra.mxu0 %v48
    %v84 = vpop.f32.mrf.mxu0
    %v85 = vadd.f32 %v27, %v84
    %v86 = vpop.f32.mrf.mxu0
    %v87 = vpop.f32.mrf.mxu0
    %v88 = vadd.f32 %v27, %v87
    %v89 = vpop.f32.mrf.mxu0
    %90 = vdwg.mxu0
    %vm91 = vcmask 408576
    %92 = vst.msk [vmem:[#allocation2] sm:$0xff] %vm91, %v85
    %93 = vst.msk [vmem:[#allocation2 + $0x8] sm:$0xff] %vm91, %v88
    // Predicated region
    $region14: #{cs_lstm_forward.9} parent=1 // pred_check
      _
    $region15: #{cs_lstm_forward.9} parent=1 // pred_check_branch
      %95 = sbr.rel (0) target = $region17
    $region16: #{cs_lstm_forward.9} parent=1 // pred_region
      %s97 = ssub.s32 256, 256
      %98 = vsyncadd [#allocation3], %s97
      %s99 = sshll.u32 [#allocation2], 4
      %s100 = int_to_ptr.vmem [resolvable:$true] %s99
      %105 = dma.vmem_to_hbm [thread:$0]  %s100, 256, %s3, [#allocation3], 128, 128, 8
    $region17: #{cs_lstm_forward.9} parent=1 // pred_fallthru
      _
    // Predicated region
    $region18: #{cs_lstm_forward.9} parent=1 // pred_check
      _
    $region19: #{cs_lstm_forward.9} parent=1 // pred_check_branch
      %107 = sbr.rel (0) target = $region21
    $region20: #{cs_lstm_forward.9} parent=1 // pred_region
      %108 = dma.done [#allocation3], 256
    $region21: #{cs_lstm_forward.9} parent=1 // pred_fallthru
      _
    %109 = vsyncpa [#allocation3], 1

// kernel: cs_lstm_forward.6
$region0: #{cs_lstm_forward.6}
  #allocation0 [shape = 'u32[]', space=smem, size = 0x4, offset = 0x4, fixed_abs, tag = 'smem constant byte address 0x4 - core index']
  #allocation1 [shape = 'u32[144,128]{1,0:T(1,128)}', space=vmem, size = 0x12000, scoped, tag = 'internal scratch']
  %s0 = inlined_call_operand.vmem [shape: f32[8,2,144], index: 0, kind: input, shape index: {}]
  %s1 = inlined_call_operand.vmem [shape: bf16[32,144], index: 1, kind: input, shape index: {}]
  %s2 = inlined_call_operand.vmem [shape: bf16[16,32], index: 2, kind: input, shape index: {}]
  %s3 = inlined_call_operand.vmem [shape: f32[2,32], index: 3, kind: input, shape index: {}]
  %s4 = inlined_call_operand.vmem [shape: f32[2,32], index: 4, kind: input, shape index: {}]
  %s5 = inlined_call_operand.vmem [shape: f32[2,16], index: 5, kind: input, shape index: {}]
  %s6 = inlined_call_operand.vmem [shape: f32[8,2,32], index: 6, kind: output, shape index: {0}]
  %s7 = inlined_call_operand.vmem [shape: f32[2,32], index: 7, kind: output, shape index: {1}]
  %s8 = inlined_call_operand.vmem [shape: f32[2,32], index: 8, kind: output, shape index: {2}]
  %s9 = inlined_call_operand.hbm [shape: f32[2,16], index: 9, kind: output, shape index: {3}]
  %10 = xla_tuple %s6, %s7, %s8, %s9
  %s11 = sld [smem:[#allocation0]]
  $region62: #{cs_lstm_forward.6} parent=0
    _
  %s13 = ssub.s32 1, %s11
  %s14 = scalar_select 0, %s13, %s11
  $region1: #{cs_lstm_forward.6} parent=0
    #allocation2 [shape = 'u8[1024]{0}', space=vmem, size = 0x400, scoped, tag = 'output window, operand 3, single buffered']
    #allocation3 [shape = 's32[1]{0}', space=sflag, size = 0x4, scoped, tag = 'scoped memory for cs_lstm_forward.6']
    %15 = vsyncpa [#allocation3], 0
    // Predicated region
    $region2: #{cs_lstm_forward.6} parent=1 // pred_check
      _
    $region3: #{cs_lstm_forward.6} parent=1 // pred_check_branch
      %17 = sbr.rel (0) target = $region5
    $region4: #{cs_lstm_forward.6} parent=1 // pred_region
      _
    $region5: #{cs_lstm_forward.6} parent=1 // pred_fallthru
      _
    // Predicated region
    $region6: #{cs_lstm_forward.6} parent=1 // pred_check
      _
    $region7: #{cs_lstm_forward.6} parent=1 // pred_check_branch
      %19 = sbr.rel (0) target = $region9
    $region8: #{cs_lstm_forward.6} parent=1 // pred_region
      _
    $region9: #{cs_lstm_forward.6} parent=1 // pred_fallthru
      _
    // Predicated region
    $region10: #{cs_lstm_forward.6} parent=1 // pred_check
      _
    $region11: #{cs_lstm_forward.6} parent=1 // pred_check_branch
      %21 = sbr.rel (0) target = $region13
    $region12: #{cs_lstm_forward.6} parent=1 // pred_region
      _
    $region13: #{cs_lstm_forward.6} parent=1 // pred_fallthru
      _
    // Predicated region
    $region14: #{cs_lstm_forward.6} parent=1 // pred_check
      _
    $region15: #{cs_lstm_forward.6} parent=1 // pred_check_branch
      %23 = sbr.rel (0) target = $region17
    $region16: #{cs_lstm_forward.6} parent=1 // pred_region
      _
    $region17: #{cs_lstm_forward.6} parent=1 // pred_fallthru
      _
    // Predicated region
    $region18: #{cs_lstm_forward.6} parent=1 // pred_check
      _
    $region19: #{cs_lstm_forward.6} parent=1 // pred_check_branch
      %25 = sbr.rel (0) target = $region21
    $region20: #{cs_lstm_forward.6} parent=1 // pred_region
      _
    $region21: #{cs_lstm_forward.6} parent=1 // pred_fallthru
      _
    // Predicated region
    $region22: #{cs_lstm_forward.6} parent=1 // pred_check
      _
    $region23: #{cs_lstm_forward.6} parent=1 // pred_check_branch
      %27 = sbr.rel (0) target = $region25
    $region24: #{cs_lstm_forward.6} parent=1 // pred_region
      _
    $region25: #{cs_lstm_forward.6} parent=1 // pred_fallthru
      _
    %p29 = scmp.eq.s32.totalorder 0, 0
    // Predicated region
    $region26: #{cs_lstm_forward.6} parent=1 // pred_check
      %p30 = pneg %p29
    $region27: #{cs_lstm_forward.6} parent=1 // pred_check_branch
      %32 = sbr.rel (%p30) target = $region29
    $region28: #{cs_lstm_forward.6} parent=1 // pred_region
      %v33 = vld [vmem:[%s3] sm:$0x3]
      %vm34 = vcmask 254976
      %35 = vst.msk [vmem:[%s7] sm:$0x3] %vm34, %v33
      %v36 = vld [vmem:[%s4] sm:$0x3]
      %37 = vst.msk [vmem:[%s8] sm:$0x3] %vm34, %v36
      %v38 = vld [vmem:[%s5] sm:$0x3]
      %vm39 = vcmask 123904
      %40 = vst.msk [vmem:[#allocation2] sm:$0x3] %vm39, %v38
    $region29: #{cs_lstm_forward.6} parent=1 // pred_fallthru
      _
    %v41 = vld [vmem:[%s1] sm:$0xff]
    %v42 = vld [vmem:[%s1 + $0x8] sm:$0xff]
    %v43 = vld [vmem:[%s1 + $0x10] sm:$0xff]
    %v44 = vld [vmem:[%s1 + $0x18] sm:$0xff]
    %v45 = vld [vmem:[%s2] sm:$0xf]
    %v46 = vld [vmem:[%s2 + $0x4] sm:$0xf]
    %v47 = vld [vmem:[%s7] sm:$0x3]
    %v48 = vld [vmem:[%s8] sm:$0x3]
    %v49 = vld [vmem:[#allocation2] sm:$0x3]
    %v50 = vld [vmem:[%s0] sm:$0xf]
    %v51 = vpack.c.bf16 %v47, %v47
    %v56 = vunpack.c.l.b16 %v41
    %v57 = vunpack.c.h.b16 %v41
    %v58 = vunpack.c.l.b16 %v42
    %v59 = vunpack.c.h.b16 %v42
    %v60 = vunpack.c.l.b16 %v43
    %v61 = vunpack.c.h.b16 %v43
    %v62 = vunpack.c.l.b16 %v44
    %v63 = vunpack.c.h.b16 %v44
    %v64 = vpack.c.b16 %v58, %v56
    %v65 = vpack.c.b16 %v59, %v57
    %v66 = vpack.c.b16 %v62, %v60
    %v67 = vpack.c.b16 %v63, %v61
    %vm72 = vcmask 261120
    %v74 = vsel %vm72, %v51, 0
    %76 = vmatprep.subr.bf16.mxu0 0
    %77 = vmatpush1.bf16.msra.mxu0 0
    %78 = vmatprep.subr.bf16.mxu0 0
    %79 = vmatpush1.bf16.msra.mxu0 0
    %80 = vmatprep.subr.bf16.mxu0 0
    %81 = vmatpush1.bf16.msra.mxu0 0
    %82 = vmatprep.subr.bf16.mxu0 0
    %83 = vmatpush1.bf16.msra.mxu0 0
    %84 = vmatprep.subr.bf16.mxu0 0
    %85 = vmatpush1.bf16.msra.mxu0 0
    %86 = vmatprep.subr.bf16.mxu0 0
    %87 = vmatpush1.bf16.msra.mxu0 0
    %88 = vmatprep.subr.bf16.mxu0 %v67
    %89 = vmatpush1.bf16.msra.mxu0 %v66
    %90 = vmatprep.subr.bf16.mxu0 %v65
    %91 = vmatpush1.bf16.msra.mxu0 %v64
    %92 = vmatprep.subr.bf16.mxu0 0
    %93 = vmatpush2.bf16.msra.mxu0 0
    %94 = vmatprep.subr.bf16.mxu0 0
    %95 = vmatpush2.bf16.msra.mxu0 0
    %96 = vmatprep.subr.bf16.mxu0 0
    %97 = vmatpush2.bf16.msra.mxu0 0
    %98 = vmatprep.subr.bf16.mxu0 0
    %99 = vmatpush2.bf16.msra.mxu0 0
    %100 = vmatprep.subr.bf16.mxu0 0
    %101 = vmatpush2.bf16.msra.mxu0 0
    %102 = vmatprep.subr.bf16.mxu0 0
    %103 = vmatpush2.bf16.msra.mxu0 0
    %104 = vmatprep.subr.bf16.mxu0 0
    %105 = vmatpush2.bf16.msra.mxu0 0
    %106 = vmatprep.subr.bf16.mxu0 0
    %107 = vmatpush2.bf16.msra.mxu0 0
    %108 = vmatprep.mubr.bf16.mxu0 0
    %109 = vmatmul.mubr.bf16.gmra.mxu0 %v74
    %v110 = vpop.f32.mrf.mxu0
    %v111 = vadd.f32 0.0, %v110
    %v112 = vpop.f32.mrf.mxu0
    %v113 = vadd.f32 0.0, %v112
    %v114 = vpop.f32.mrf.mxu0
    %v115 = vpop.f32.mrf.mxu0
    %116 = vdwg.mxu0
    %v119 = vcombine.low %v111, %v113
    %v121 = vunpack.c.l.s4 1983009808
    %v122 = vunpack.c.0.s8 %v121
    %v123 = vlaneseq
    %v124 = vshrl.u32 %v123, 7
    %v125 = vsub.s32 %v122, %v124
    %v126 = vrot.slane %v119, %v125
    %v128 = vadd.f32 %v50, %v126
    %v129 = vxor.u32 %v128, 2147483648
    %v130 = vmul.f32 %v129, 1.442695
    %v131 = vpow.pop %v130
    %v132 = vadd.f32 %v131, 1.0
    %v133 = vrcp.pop %v132
    %v134 = vmul.f32 1.0, %v133
    %v135 = vtanh.pop %v128
    %v137 = vrot.slane %v128, 2
    %v139 = vxor.u32 %v137, 2147483648
    %v140 = vmul.f32 %v139, 1.442695
    %v141 = vpow.pop %v140
    %v142 = vadd.f32 %v141, 1.0
    %v143 = vrcp.pop %v142
    %v144 = vmul.f32 1.0, %v143
    %v145 = vmul.f32 %v144, %v49
    %v148 = vunpack.c.l.s4 1983009808
    %v149 = vunpack.c.0.s8 %v148
    %v150 = vlaneseq
    %v151 = vshrl.u32 %v150, 7
    %v152 = vsub.s32 %v149, %v151
    %v153 = vrot.slane %v48, %v152
    %154 = vrot.lane.b32.xlu0 %v153, 32
    %v155 = vpop.permute.xlu0 %154
    %v157 = vmul.f32 %v134, %v155
    %159 = vrot.lane.b32.xlu0 %v135, 64
    %v160 = vpop.permute.xlu0 %159
    %v162 = vmul.f32 %v134, %v160
    %164 = vrot.lane.b32.xlu0 %v162, 32
    %v165 = vpop.permute.xlu0 %164
    %v167 = vadd.f32 %v157, %v165
    %v168 = vpack.c.bf16 %v145, %v145
    %v171 = vunpack.c.l.b16 %v45
    %v172 = vunpack.c.l.b16 %v46
    %v173 = vpack.c.b16 %v172, %v171
    %vm175 = vcmask 130048
    %v177 = vsel %vm175, %v168, 0
    %179 = vmatprep.subr.bf16.mxu0 0
    %180 = vmatpush1.bf16.msra.mxu0 0
    %181 = vmatprep.subr.bf16.mxu0 0
    %182 = vmatpush1.bf16.msra.mxu0 0
    %183 = vmatprep.subr.bf16.mxu0 0
    %184 = vmatpush1.bf16.msra.mxu0 0
    %185 = vmatprep.subr.bf16.mxu0 0
    %186 = vmatpush1.bf16.msra.mxu0 0
    %187 = vmatprep.subr.bf16.mxu0 0
    %188 = vmatpush1.bf16.msra.mxu0 0
    %189 = vmatprep.subr.bf16.mxu0 0
    %190 = vmatpush1.bf16.msra.mxu0 0
    %191 = vmatprep.subr.bf16.mxu0 0
    %192 = vmatpush1.bf16.msra.mxu0 0
    %193 = vmatprep.subr.bf16.mxu0 0
    %194 = vmatpush1.bf16.msra.mxu0 %v173
    %195 = vmatprep.subr.bf16.mxu0 0
    %196 = vmatpush2.bf16.msra.mxu0 0
    %197 = vmatprep.subr.bf16.mxu0 0
    %198 = vmatpush2.bf16.msra.mxu0 0
    %199 = vmatprep.subr.bf16.mxu0 0
    %200 = vmatpush2.bf16.msra.mxu0 0
    %201 = vmatprep.subr.bf16.mxu0 0
    %202 = vmatpush2.bf16.msra.mxu0 0
    %203 = vmatprep.subr.bf16.mxu0 0
    %204 = vmatpush2.bf16.msra.mxu0 0
    %205 = vmatprep.subr.bf16.mxu0 0
    %206 = vmatpush2.bf16.msra.mxu0 0
    %207 = vmatprep.subr.bf16.mxu0 0
    %208 = vmatpush2.bf16.msra.mxu0 0
    %209 = vmatprep.subr.bf16.mxu0 0
    %210 = vmatpush2.bf16.msra.mxu0 0
    %211 = vmatprep.mubr.bf16.mxu0 0
    %212 = vmatmul.mubr.bf16.gmra.mxu0 %v177
    %v213 = vpop.f32.mrf.mxu0
    %v214 = vadd.f32 0.0, %v213
    %v215 = vpop.f32.mrf.mxu0
    %v216 = vpop.f32.mrf.mxu0
    %v217 = vpop.f32.mrf.mxu0
    %218 = vdwg.mxu0
    %v219 = vtanh.pop %v214
    %v222 = vunpack.c.l.s4 1983009808
    %v223 = vunpack.c.0.s8 %v222
    %v224 = vlaneseq
    %v225 = vshrl.u32 %v224, 7
    %v226 = vsub.s32 %v223, %v225
    %v227 = vrot.slane %v219, %v226
    %228 = vrot.lane.b32.xlu0 %v227, 32
    %v229 = vpop.permute.xlu0 %228
    %v231 = vadd.f32 %v167, %v229
    %v232 = vtanh.pop %v231
    %234 = vrot.lane.b32.xlu0 %v232, 64
    %v235 = vpop.permute.xlu0 %234
    %v237 = vmul.f32 %v134, %v235
    %v240 = vunpack.c.l.s4 1983009808
    %v241 = vunpack.c.0.s8 %v240
    %v242 = vlaneseq
    %v243 = vshrl.u32 %v242, 7
    %v244 = vsub.s32 %v241, %v243
    %v245 = vrot.slane %v237, %v244
    %246 = vrot.lane.b32.xlu0 %v245, 32
    %v247 = vpop.permute.xlu0 %246
    %vm249 = vcmask 254976
    %250 = vst.msk [vmem:[%s6] sm:$0x3] %vm249, %v247
    %s251 = scalar_lea.vmem %s0, 4
    %v252 = vld [vmem:[%s251] sm:$0xf]
    %v253 = vpack.c.bf16 %v237, %v237
    %255 = vrot.lane.b32.xlu0 %v253, 32
    %v256 = vpop.permute.xlu0 %255
    %v258 = vsel %vm72, %v256, 0
    %260 = vmatprep.subr.bf16.mxu0 0
    %261 = vmatpush1.bf16.msra.mxu0 0
    %262 = vmatprep.subr.bf16.mxu0 0
    %263 = vmatpush1.bf16.msra.mxu0 0
    %264 = vmatprep.subr.bf16.mxu0 0
    %265 = vmatpush1.bf16.msra.mxu0 0
    %266 = vmatprep.subr.bf16.mxu0 0
    %267 = vmatpush1.bf16.msra.mxu0 0
    %268 = vmatprep.subr.bf16.mxu0 0
    %269 = vmatpush1.bf16.msra.mxu0 0
    %270 = vmatprep.subr.bf16.mxu0 0
    %271 = vmatpush1.bf16.msra.mxu0 0
    %272 = vmatprep.subr.bf16.mxu0 %v67
    %273 = vmatpush1.bf16.msra.mxu0 %v66
    %274 = vmatprep.subr.bf16.mxu0 %v65
    %275 = vmatpush1.bf16.msra.mxu0 %v64
    %276 = vmatprep.subr.bf16.mxu0 0
    %277 = vmatpush2.bf16.msra.mxu0 0
    %278 = vmatprep.subr.bf16.mxu0 0
    %279 = vmatpush2.bf16.msra.mxu0 0
    %280 = vmatprep.subr.bf16.mxu0 0
    %281 = vmatpush2.bf16.msra.mxu0 0
    %282 = vmatprep.subr.bf16.mxu0 0
    %283 = vmatpush2.bf16.msra.mxu0 0
    %284 = vmatprep.subr.bf16.mxu0 0
    %285 = vmatpush2.bf16.msra.mxu0 0
    %286 = vmatprep.subr.bf16.mxu0 0
    %287 = vmatpush2.bf16.msra.mxu0 0
    %288 = vmatprep.subr.bf16.mxu0 0
    %289 = vmatpush2.bf16.msra.mxu0 0
    %290 = vmatprep.subr.bf16.mxu0 0
    %291 = vmatpush2.bf16.msra.mxu0 0
    %292 = vmatprep.mubr.bf16.mxu0 0
    %293 = vmatmul.mubr.bf16.gmra.mxu0 %v258
    %v294 = vpop.f32.mrf.mxu0
    %v295 = vadd.f32 0.0, %v294
    %v296 = vpop.f32.mrf.mxu0
    %v297 = vadd.f32 0.0, %v296
    %v298 = vpop.f32.mrf.mxu0
    %v299 = vpop.f32.mrf.mxu0
    %300 = vdwg.mxu0
    %v303 = vcombine.low %v295, %v297
    %v305 = vunpack.c.l.s4 1983009808
    %v306 = vunpack.c.0.s8 %v305
    %v307 = vlaneseq
    %v308 = vshrl.u32 %v307, 7
    %v309 = vsub.s32 %v306, %v308
    %v310 = vrot.slane %v303, %v309
    %v312 = vadd.f32 %v252, %v310
    %v313 = vxor.u32 %v312, 2147483648
    %v314 = vmul.f32 %v313, 1.442695
    %v315 = vpow.pop %v314
    %v316 = vadd.f32 %v315, 1.0
    %v317 = vrcp.pop %v316
    %v318 = vmul.f32 1.0, %v317
    %v319 = vtanh.pop %v312
    %v321 = vrot.slane %v312, 2
    %v323 = vxor.u32 %v321, 2147483648
    %v324 = vmul.f32 %v323, 1.442695
    %v325 = vpow.pop %v324
    %v326 = vadd.f32 %v325, 1.0
    %v327 = vrcp.pop %v326
    %v328 = vmul.f32 1.0, %v327
    %v329 = vmul.f32 %v328, %v145
    %v330 = vmul.f32 %v318, %v231
    %332 = vrot.lane.b32.xlu0 %v319, 64
    %v333 = vpop.permute.xlu0 %332
    %v335 = vmul.f32 %v318, %v333
    %337 = vrot.lane.b32.xlu0 %v335, 32
    %v338 = vpop.permute.xlu0 %337
    %v340 = vadd.f32 %v330, %v338
    %v341 = vpack.c.bf16 %v329, %v329
    %v343 = vsel %vm175, %v341, 0
    %345 = vmatprep.subr.bf16.mxu0 0
    %346 = vmatpush1.bf16.msra.mxu0 0
    %347 = vmatprep.subr.bf16.mxu0 0
    %348 = vmatpush1.bf16.msra.mxu0 0
    %349 = vmatprep.subr.bf16.mxu0 0
    %350 = vmatpush1.bf16.msra.mxu0 0
    %351 = vmatprep.subr.bf16.mxu0 0
    %352 = vmatpush1.bf16.msra.mxu0 0
    %353 = vmatprep.subr.bf16.mxu0 0
    %354 = vmatpush1.bf16.msra.mxu0 0
    %355 = vmatprep.subr.bf16.mxu0 0
    %356 = vmatpush1.bf16.msra.mxu0 0
    %357 = vmatprep.subr.bf16.mxu0 0
    %358 = vmatpush1.bf16.msra.mxu0 0
    %359 = vmatprep.subr.bf16.mxu0 0
    %360 = vmatpush1.bf16.msra.mxu0 %v173
    %361 = vmatprep.subr.bf16.mxu0 0
    %362 = vmatpush2.bf16.msra.mxu0 0
    %363 = vmatprep.subr.bf16.mxu0 0
    %364 = vmatpush2.bf16.msra.mxu0 0
    %365 = vmatprep.subr.bf16.mxu0 0
    %366 = vmatpush2.bf16.msra.mxu0 0
    %367 = vmatprep.subr.bf16.mxu0 0
    %368 = vmatpush2.bf16.msra.mxu0 0
    %369 = vmatprep.subr.bf16.mxu0 0
    %370 = vmatpush2.bf16.msra.mxu0 0
    %371 = vmatprep.subr.bf16.mxu0 0
    %372 = vmatpush2.bf16.msra.mxu0 0
    %373 = vmatprep.subr.bf16.mxu0 0
    %374 = vmatpush2.bf16.msra.mxu0 0
    %375 = vmatprep.subr.bf16.mxu0 0
    %376 = vmatpush2.bf16.msra.mxu0 0
    %377 = vmatprep.mubr.bf16.mxu0 0
    %378 = vmatmul.mubr.bf16.gmra.mxu0 %v343
    %v379 = vpop.f32.mrf.mxu0
    %v380 = vadd.f32 0.0, %v379
    %v381 = vpop.f32.mrf.mxu0
    %v382 = vpop.f32.mrf.mxu0
    %v383 = vpop.f32.mrf.mxu0
    %384 = vdwg.mxu0
    %v385 = vtanh.pop %v380
    %v388 = vunpack.c.l.s4 1983009808
    %v389 = vunpack.c.0.s8 %v388
    %v390 = vlaneseq
    %v391 = vshrl.u32 %v390, 7
    %v392 = vsub.s32 %v389, %v391
    %v393 = vrot.slane %v385, %v392
    %394 = vrot.lane.b32.xlu0 %v393, 32
    %v395 = vpop.permute.xlu0 %394
    %v397 = vadd.f32 %v340, %v395
    %v398 = vtanh.pop %v397
    %400 = vrot.lane.b32.xlu0 %v398, 64
    %v401 = vpop.permute.xlu0 %400
    %v403 = vmul.f32 %v318, %v401
    %v406 = vunpack.c.l.s4 1983009808
    %v407 = vunpack.c.0.s8 %v406
    %v408 = vlaneseq
    %v409 = vshrl.u32 %v408, 7
    %v410 = vsub.s32 %v407, %v409
    %v411 = vrot.slane %v403, %v410
    %412 = vrot.lane.b32.xlu0 %v411, 32
    %v413 = vpop.permute.xlu0 %412
    %s415 = scalar_lea.vmem %s6, 2
    %416 = vst.msk [vmem:[%s415] sm:$0x3] %vm249, %v413
    %s417 = scalar_lea.vmem %s0, 8
    %v418 = vld [vmem:[%s417] sm:$0xf]
    %v419 = vpack.c.bf16 %v403, %v403
    %421 = vrot.lane.b32.xlu0 %v419, 32
    %v422 = vpop.permute.xlu0 %421
    %v424 = vsel %vm72, %v422, 0
    %426 = vmatprep.subr.bf16.mxu0 0
    %427 = vmatpush1.bf16.msra.mxu0 0
    %428 = vmatprep.subr.bf16.mxu0 0
    %429 = vmatpush1.bf16.msra.mxu0 0
    %430 = vmatprep.subr.bf16.mxu0 0
    %431 = vmatpush1.bf16.msra.mxu0 0
    %432 = vmatprep.subr.bf16.mxu0 0
    %433 = vmatpush1.bf16.msra.mxu0 0
    %434 = vmatprep.subr.bf16.mxu0 0
    %435 = vmatpush1.bf16.msra.mxu0 0
    %436 = vmatprep.subr.bf16.mxu0 0
    %437 = vmatpush1.bf16.msra.mxu0 0
    %438 = vmatprep.subr.bf16.mxu0 %v67
    %439 = vmatpush1.bf16.msra.mxu0 %v66
    %440 = vmatprep.subr.bf16.mxu0 %v65
    %441 = vmatpush1.bf16.msra.mxu0 %v64
    %442 = vmatprep.subr.bf16.mxu0 0
    %443 = vmatpush2.bf16.msra.mxu0 0
    %444 = vmatprep.subr.bf16.mxu0 0
    %445 = vmatpush2.bf16.msra.mxu0 0
    %446 = vmatprep.subr.bf16.mxu0 0
    %447 = vmatpush2.bf16.msra.mxu0 0
    %448 = vmatprep.subr.bf16.mxu0 0
    %449 = vmatpush2.bf16.msra.mxu0 0
    %450 = vmatprep.subr.bf16.mxu0 0
    %451 = vmatpush2.bf16.msra.mxu0 0
    %452 = vmatprep.subr.bf16.mxu0 0
    %453 = vmatpush2.bf16.msra.mxu0 0
    %454 = vmatprep.subr.bf16.mxu0 0
    %455 = vmatpush2.bf16.msra.mxu0 0
    %456 = vmatprep.subr.bf16.mxu0 0
    %457 = vmatpush2.bf16.msra.mxu0 0
    %458 = vmatprep.mubr.bf16.mxu0 0
    %459 = vmatmul.mubr.bf16.gmra.mxu0 %v424
    %v460 = vpop.f32.mrf.mxu0
    %v461 = vadd.f32 0.0, %v460
    %v462 = vpop.f32.mrf.mxu0
    %v463 = vadd.f32 0.0, %v462
    %v464 = vpop.f32.mrf.mxu0
    %v465 = vpop.f32.mrf.mxu0
    %466 = vdwg.mxu0
    %v469 = vcombine.low %v461, %v463
    %v471 = vunpack.c.l.s4 1983009808
    %v472 = vunpack.c.0.s8 %v471
    %v473 = vlaneseq
    %v474 = vshrl.u32 %v473, 7
    %v475 = vsub.s32 %v472, %v474
    %v476 = vrot.slane %v469, %v475
    %v478 = vadd.f32 %v418, %v476
    %v479 = vxor.u32 %v478, 2147483648
    %v480 = vmul.f32 %v479, 1.442695
    %v481 = vpow.pop %v480
    %v482 = vadd.f32 %v481, 1.0
    %v483 = vrcp.pop %v482
    %v484 = vmul.f32 1.0, %v483
    %v485 = vtanh.pop %v478
    %v487 = vrot.slane %v478, 2
    %v489 = vxor.u32 %v487, 2147483648
    %v490 = vmul.f32 %v489, 1.442695
    %v491 = vpow.pop %v490
    %v492 = vadd.f32 %v491, 1.0
    %v493 = vrcp.pop %v492
    %v494 = vmul.f32 1.0, %v493
    %v495 = vmul.f32 %v494, %v329
    %v496 = vmul.f32 %v484, %v397
    %498 = vrot.lane.b32.xlu0 %v485, 64
    %v499 = vpop.permute.xlu0 %498
    %v501 = vmul.f32 %v484, %v499
    %503 = vrot.lane.b32.xlu0 %v501, 32
    %v504 = vpop.permute.xlu0 %503
    %v506 = vadd.f32 %v496, %v504
    %v507 = vpack.c.bf16 %v495, %v495
    %v509 = vsel %vm175, %v507, 0
    %511 = vmatprep.subr.bf16.mxu0 0
    %512 = vmatpush1.bf16.msra.mxu0 0
    %513 = vmatprep.subr.bf16.mxu0 0
    %514 = vmatpush1.bf16.msra.mxu0 0
    %515 = vmatprep.subr.bf16.mxu0 0
    %516 = vmatpush1.bf16.msra.mxu0 0
    %517 = vmatprep.subr.bf16.mxu0 0
    %518 = vmatpush1.bf16.msra.mxu0 0
    %519 = vmatprep.subr.bf16.mxu0 0
    %520 = vmatpush1.bf16.msra.mxu0 0
    %521 = vmatprep.subr.bf16.mxu0 0
    %522 = vmatpush1.bf16.msra.mxu0 0
    %523 = vmatprep.subr.bf16.mxu0 0
    %524 = vmatpush1.bf16.msra.mxu0 0
    %525 = vmatprep.subr.bf16.mxu0 0
    %526 = vmatpush1.bf16.msra.mxu0 %v173
    %527 = vmatprep.subr.bf16.mxu0 0
    %528 = vmatpush2.bf16.msra.mxu0 0
    %529 = vmatprep.subr.bf16.mxu0 0
    %530 = vmatpush2.bf16.msra.mxu0 0
    %531 = vmatprep.subr.bf16.mxu0 0
    %532 = vmatpush2.bf16.msra.mxu0 0
    %533 = vmatprep.subr.bf16.mxu0 0
    %534 = vmatpush2.bf16.msra.mxu0 0
    %535 = vmatprep.subr.bf16.mxu0 0
    %536 = vmatpush2.bf16.msra.mxu0 0
    %537 = vmatprep.subr.bf16.mxu0 0
    %538 = vmatpush2.bf16.msra.mxu0 0
    %539 = vmatprep.subr.bf16.mxu0 0
    %540 = vmatpush2.bf16.msra.mxu0 0
    %541 = vmatprep.subr.bf16.mxu0 0
    %542 = vmatpush2.bf16.msra.mxu0 0
    %543 = vmatprep.mubr.bf16.mxu0 0
    %544 = vmatmul.mubr.bf16.gmra.mxu0 %v509
    %v545 = vpop.f32.mrf.mxu0
    %v546 = vadd.f32 0.0, %v545
    %v547 = vpop.f32.mrf.mxu0
    %v548 = vpop.f32.mrf.mxu0
    %v549 = vpop.f32.mrf.mxu0
    %550 = vdwg.mxu0
    %v551 = vtanh.pop %v546
    %v554 = vunpack.c.l.s4 1983009808
    %v555 = vunpack.c.0.s8 %v554
    %v556 = vlaneseq
    %v557 = vshrl.u32 %v556, 7
    %v558 = vsub.s32 %v555, %v557
    %v559 = vrot.slane %v551, %v558
    %560 = vrot.lane.b32.xlu0 %v559, 32
    %v561 = vpop.permute.xlu0 %560
    %v563 = vadd.f32 %v506, %v561
    %v564 = vtanh.pop %v563
    %566 = vrot.lane.b32.xlu0 %v564, 64
    %v567 = vpop.permute.xlu0 %566
    %v569 = vmul.f32 %v484, %v567
    %v572 = vunpack.c.l.s4 1983009808
    %v573 = vunpack.c.0.s8 %v572
    %v574 = vlaneseq
    %v575 = vshrl.u32 %v574, 7
    %v576 = vsub.s32 %v573, %v575
    %v577 = vrot.slane %v569, %v576
    %578 = vrot.lane.b32.xlu0 %v577, 32
    %v579 = vpop.permute.xlu0 %578
    %s581 = scalar_lea.vmem %s6, 4
    %582 = vst.msk [vmem:[%s581] sm:$0x3] %vm249, %v579
    %s583 = scalar_lea.vmem %s0, 12
    %v584 = vld [vmem:[%s583] sm:$0xf]
    %v585 = vpack.c.bf16 %v569, %v569
    %587 = vrot.lane.b32.xlu0 %v585, 32
    %v588 = vpop.permute.xlu0 %587
    %v590 = vsel %vm72, %v588, 0
    %592 = vmatprep.subr.bf16.mxu0 0
    %593 = vmatpush1.bf16.msra.mxu0 0
    %594 = vmatprep.subr.bf16.mxu0 0
    %595 = vmatpush1.bf16.msra.mxu0 0
    %596 = vmatprep.subr.bf16.mxu0 0
    %597 = vmatpush1.bf16.msra.mxu0 0
    %598 = vmatprep.subr.bf16.mxu0 0
    %599 = vmatpush1.bf16.msra.mxu0 0
    %600 = vmatprep.subr.bf16.mxu0 0
    %601 = vmatpush1.bf16.msra.mxu0 0
    %602 = vmatprep.subr.bf16.mxu0 0
    %603 = vmatpush1.bf16.msra.mxu0 0
    %604 = vmatprep.subr.bf16.mxu0 %v67
    %605 = vmatpush1.bf16.msra.mxu0 %v66
    %606 = vmatprep.subr.bf16.mxu0 %v65
    %607 = vmatpush1.bf16.msra.mxu0 %v64
    %608 = vmatprep.subr.bf16.mxu0 0
    %609 = vmatpush2.bf16.msra.mxu0 0
    %610 = vmatprep.subr.bf16.mxu0 0
    %611 = vmatpush2.bf16.msra.mxu0 0
    %612 = vmatprep.subr.bf16.mxu0 0
    %613 = vmatpush2.bf16.msra.mxu0 0
    %614 = vmatprep.subr.bf16.mxu0 0
    %615 = vmatpush2.bf16.msra.mxu0 0
    %616 = vmatprep.subr.bf16.mxu0 0
    %617 = vmatpush2.bf16.msra.mxu0 0
    %618 = vmatprep.subr.bf16.mxu0 0
    %619 = vmatpush2.bf16.msra.mxu0 0
    %620 = vmatprep.subr.bf16.mxu0 0
    %621 = vmatpush2.bf16.msra.mxu0 0
    %622 = vmatprep.subr.bf16.mxu0 0
    %623 = vmatpush2.bf16.msra.mxu0 0
    %624 = vmatprep.mubr.bf16.mxu0 0
    %625 = vmatmul.mubr.bf16.gmra.mxu0 %v590
    %v626 = vpop.f32.mrf.mxu0
    %v627 = vadd.f32 0.0, %v626
    %v628 = vpop.f32.mrf.mxu0
    %v629 = vadd.f32 0.0, %v628
    %v630 = vpop.f32.mrf.mxu0
    %v631 = vpop.f32.mrf.mxu0
    %632 = vdwg.mxu0
    %v635 = vcombine.low %v627, %v629
    %v637 = vunpack.c.l.s4 1983009808
    %v638 = vunpack.c.0.s8 %v637
    %v639 = vlaneseq
    %v640 = vshrl.u32 %v639, 7
    %v641 = vsub.s32 %v638, %v640
    %v642 = vrot.slane %v635, %v641
    %v644 = vadd.f32 %v584, %v642
    %v645 = vxor.u32 %v644, 2147483648
    %v646 = vmul.f32 %v645, 1.442695
    %v647 = vpow.pop %v646
    %v648 = vadd.f32 %v647, 1.0
    %v649 = vrcp.pop %v648
    %v650 = vmul.f32 1.0, %v649
    %v651 = vtanh.pop %v644
    %v653 = vrot.slane %v644, 2
    %v655 = vxor.u32 %v653, 2147483648
    %v656 = vmul.f32 %v655, 1.442695
    %v657 = vpow.pop %v656
    %v658 = vadd.f32 %v657, 1.0
    %v659 = vrcp.pop %v658
    %v660 = vmul.f32 1.0, %v659
    %v661 = vmul.f32 %v660, %v495
    %v662 = vmul.f32 %v650, %v563
    %664 = vrot.lane.b32.xlu0 %v651, 64
    %v665 = vpop.permute.xlu0 %664
    %v667 = vmul.f32 %v650, %v665
    %669 = vrot.lane.b32.xlu0 %v667, 32
    %v670 = vpop.permute.xlu0 %669
    %v672 = vadd.f32 %v662, %v670
    %v673 = vpack.c.bf16 %v661, %v661
    %v675 = vsel %vm175, %v673, 0
    %677 = vmatprep.subr.bf16.mxu0 0
    %678 = vmatpush1.bf16.msra.mxu0 0
    %679 = vmatprep.subr.bf16.mxu0 0
    %680 = vmatpush1.bf16.msra.mxu0 0
    %681 = vmatprep.subr.bf16.mxu0 0
    %682 = vmatpush1.bf16.msra.mxu0 0
    %683 = vmatprep.subr.bf16.mxu0 0
    %684 = vmatpush1.bf16.msra.mxu0 0
    %685 = vmatprep.subr.bf16.mxu0 0
    %686 = vmatpush1.bf16.msra.mxu0 0
    %687 = vmatprep.subr.bf16.mxu0 0
    %688 = vmatpush1.bf16.msra.mxu0 0
    %689 = vmatprep.subr.bf16.mxu0 0
    %690 = vmatpush1.bf16.msra.mxu0 0
    %691 = vmatprep.subr.bf16.mxu0 0
    %692 = vmatpush1.bf16.msra.mxu0 %v173
    %693 = vmatprep.subr.bf16.mxu0 0
    %694 = vmatpush2.bf16.msra.mxu0 0
    %695 = vmatprep.subr.bf16.mxu0 0
    %696 = vmatpush2.bf16.msra.mxu0 0
    %697 = vmatprep.subr.bf16.mxu0 0
    %698 = vmatpush2.bf16.msra.mxu0 0
    %699 = vmatprep.subr.bf16.mxu0 0
    %700 = vmatpush2.bf16.msra.mxu0 0
    %701 = vmatprep.subr.bf16.mxu0 0
    %702 = vmatpush2.bf16.msra.mxu0 0
    %703 = vmatprep.subr.bf16.mxu0 0
    %704 = vmatpush2.bf16.msra.mxu0 0
    %705 = vmatprep.subr.bf16.mxu0 0
    %706 = vmatpush2.bf16.msra.mxu0 0
    %707 = vmatprep.subr.bf16.mxu0 0
    %708 = vmatpush2.bf16.msra.mxu0 0
    %709 = vmatprep.mubr.bf16.mxu0 0
    %710 = vmatmul.mubr.bf16.gmra.mxu0 %v675
    %v711 = vpop.f32.mrf.mxu0
    %v712 = vadd.f32 0.0, %v711
    %v713 = vpop.f32.mrf.mxu0
    %v714 = vpop.f32.mrf.mxu0
    %v715 = vpop.f32.mrf.mxu0
    %716 = vdwg.mxu0
    %v717 = vtanh.pop %v712
    %v720 = vunpack.c.l.s4 1983009808
    %v721 = vunpack.c.0.s8 %v720
    %v722 = vlaneseq
    %v723 = vshrl.u32 %v722, 7
    %v724 = vsub.s32 %v721, %v723
    %v725 = vrot.slane %v717, %v724
    %726 = vrot.lane.b32.xlu0 %v725, 32
    %v727 = vpop.permute.xlu0 %726
    %v729 = vadd.f32 %v672, %v727
    %v730 = vtanh.pop %v729
    %732 = vrot.lane.b32.xlu0 %v730, 64
    %v733 = vpop.permute.xlu0 %732
    %v735 = vmul.f32 %v650, %v733
    %v738 = vunpack.c.l.s4 1983009808
    %v739 = vunpack.c.0.s8 %v738
    %v740 = vlaneseq
    %v741 = vshrl.u32 %v740, 7
    %v742 = vsub.s32 %v739, %v741
    %v743 = vrot.slane %v735, %v742
    %744 = vrot.lane.b32.xlu0 %v743, 32
    %v745 = vpop.permute.xlu0 %744
    %s747 = scalar_lea.vmem %s6, 6
    %748 = vst.msk [vmem:[%s747] sm:$0x3] %vm249, %v745
    %s749 = scalar_lea.vmem %s0, 16
    %v750 = vld [vmem:[%s749] sm:$0xf]
    %v751 = vpack.c.bf16 %v735, %v735
    %753 = vrot.lane.b32.xlu0 %v751, 32
    %v754 = vpop.permute.xlu0 %753
    %v756 = vsel %vm72, %v754, 0
    %758 = vmatprep.subr.bf16.mxu0 0
    %759 = vmatpush1.bf16.msra.mxu0 0
    %760 = vmatprep.subr.bf16.mxu0 0
    %761 = vmatpush1.bf16.msra.mxu0 0
    %762 = vmatprep.subr.bf16.mxu0 0
    %763 = vmatpush1.bf16.msra.mxu0 0
    %764 = vmatprep.subr.bf16.mxu0 0
    %765 = vmatpush1.bf16.msra.mxu0 0
    %766 = vmatprep.subr.bf16.mxu0 0
    %767 = vmatpush1.bf16.msra.mxu0 0
    %768 = vmatprep.subr.bf16.mxu0 0
    %769 = vmatpush1.bf16.msra.mxu0 0
    %770 = vmatprep.subr.bf16.mxu0 %v67
    %771 = vmatpush1.bf16.msra.mxu0 %v66
    %772 = vmatprep.subr.bf16.mxu0 %v65
    %773 = vmatpush1.bf16.msra.mxu0 %v64
    %774 = vmatprep.subr.bf16.mxu0 0
    %775 = vmatpush2.bf16.msra.mxu0 0
    %776 = vmatprep.subr.bf16.mxu0 0
    %777 = vmatpush2.bf16.msra.mxu0 0
    %778 = vmatprep.subr.bf16.mxu0 0
    %779 = vmatpush2.bf16.msra.mxu0 0
    %780 = vmatprep.subr.bf16.mxu0 0
    %781 = vmatpush2.bf16.msra.mxu0 0
    %782 = vmatprep.subr.bf16.mxu0 0
    %783 = vmatpush2.bf16.msra.mxu0 0
    %784 = vmatprep.subr.bf16.mxu0 0
    %785 = vmatpush2.bf16.msra.mxu0 0
    %786 = vmatprep.subr.bf16.mxu0 0
    %787 = vmatpush2.bf16.msra.mxu0 0
    %788 = vmatprep.subr.bf16.mxu0 0
    %789 = vmatpush2.bf16.msra.mxu0 0
    %790 = vmatprep.mubr.bf16.mxu0 0
    %791 = vmatmul.mubr.bf16.gmra.mxu0 %v756
    %v792 = vpop.f32.mrf.mxu0
    %v793 = vadd.f32 0.0, %v792
    %v794 = vpop.f32.mrf.mxu0
    %v795 = vadd.f32 0.0, %v794
    %v796 = vpop.f32.mrf.mxu0
    %v797 = vpop.f32.mrf.mxu0
    %798 = vdwg.mxu0
    %v801 = vcombine.low %v793, %v795
    %v803 = vunpack.c.l.s4 1983009808
    %v804 = vunpack.c.0.s8 %v803
    %v805 = vlaneseq
    %v806 = vshrl.u32 %v805, 7
    %v807 = vsub.s32 %v804, %v806
    %v808 = vrot.slane %v801, %v807
    %v810 = vadd.f32 %v750, %v808
    %v811 = vxor.u32 %v810, 2147483648
    %v812 = vmul.f32 %v811, 1.442695
    %v813 = vpow.pop %v812
    %v814 = vadd.f32 %v813, 1.0
    %v815 = vrcp.pop %v814
    %v816 = vmul.f32 1.0, %v815
    %v817 = vtanh.pop %v810
    %v819 = vrot.slane %v810, 2
    %v821 = vxor.u32 %v819, 2147483648
    %v822 = vmul.f32 %v821, 1.442695
    %v823 = vpow.pop %v822
    %v824 = vadd.f32 %v823, 1.0
    %v825 = vrcp.pop %v824
    %v826 = vmul.f32 1.0, %v825
    %v827 = vmul.f32 %v826, %v661
    %v828 = vmul.f32 %v816, %v729
    %830 = vrot.lane.b32.xlu0 %v817, 64
    %v831 = vpop.permute.xlu0 %830
    %v833 = vmul.f32 %v816, %v831
    %835 = vrot.lane.b32.xlu0 %v833, 32
    %v836 = vpop.permute.xlu0 %835
    %v838 = vadd.f32 %v828, %v836
    %v839 = vpack.c.bf16 %v827, %v827
    %v841 = vsel %vm175, %v839, 0
    %843 = vmatprep.subr.bf16.mxu0 0
    %844 = vmatpush1.bf16.msra.mxu0 0
    %845 = vmatprep.subr.bf16.mxu0 0
    %846 = vmatpush1.bf16.msra.mxu0 0
    %847 = vmatprep.subr.bf16.mxu0 0
    %848 = vmatpush1.bf16.msra.mxu0 0
    %849 = vmatprep.subr.bf16.mxu0 0
    %850 = vmatpush1.bf16.msra.mxu0 0
    %851 = vmatprep.subr.bf16.mxu0 0
    %852 = vmatpush1.bf16.msra.mxu0 0
    %853 = vmatprep.subr.bf16.mxu0 0
    %854 = vmatpush1.bf16.msra.mxu0 0
    %855 = vmatprep.subr.bf16.mxu0 0
    %856 = vmatpush1.bf16.msra.mxu0 0
    %857 = vmatprep.subr.bf16.mxu0 0
    %858 = vmatpush1.bf16.msra.mxu0 %v173
    %859 = vmatprep.subr.bf16.mxu0 0
    %860 = vmatpush2.bf16.msra.mxu0 0
    %861 = vmatprep.subr.bf16.mxu0 0
    %862 = vmatpush2.bf16.msra.mxu0 0
    %863 = vmatprep.subr.bf16.mxu0 0
    %864 = vmatpush2.bf16.msra.mxu0 0
    %865 = vmatprep.subr.bf16.mxu0 0
    %866 = vmatpush2.bf16.msra.mxu0 0
    %867 = vmatprep.subr.bf16.mxu0 0
    %868 = vmatpush2.bf16.msra.mxu0 0
    %869 = vmatprep.subr.bf16.mxu0 0
    %870 = vmatpush2.bf16.msra.mxu0 0
    %871 = vmatprep.subr.bf16.mxu0 0
    %872 = vmatpush2.bf16.msra.mxu0 0
    %873 = vmatprep.subr.bf16.mxu0 0
    %874 = vmatpush2.bf16.msra.mxu0 0
    %875 = vmatprep.mubr.bf16.mxu0 0
    %876 = vmatmul.mubr.bf16.gmra.mxu0 %v841
    %v877 = vpop.f32.mrf.mxu0
    %v878 = vadd.f32 0.0, %v877
    %v879 = vpop.f32.mrf.mxu0
    %v880 = vpop.f32.mrf.mxu0
    %v881 = vpop.f32.mrf.mxu0
    %882 = vdwg.mxu0
    %v883 = vtanh.pop %v878
    %v886 = vunpack.c.l.s4 1983009808
    %v887 = vunpack.c.0.s8 %v886
    %v888 = vlaneseq
    %v889 = vshrl.u32 %v888, 7
    %v890 = vsub.s32 %v887, %v889
    %v891 = vrot.slane %v883, %v890
    %892 = vrot.lane.b32.xlu0 %v891, 32
    %v893 = vpop.permute.xlu0 %892
    %v895 = vadd.f32 %v838, %v893
    %v896 = vtanh.pop %v895
    %898 = vrot.lane.b32.xlu0 %v896, 64
    %v899 = vpop.permute.xlu0 %898
    %v901 = vmul.f32 %v816, %v899
    %v904 = vunpack.c.l.s4 1983009808
    %v905 = vunpack.c.0.s8 %v904
    %v906 = vlaneseq
    %v907 = vshrl.u32 %v906, 7
    %v908 = vsub.s32 %v905, %v907
    %v909 = vrot.slane %v901, %v908
    %910 = vrot.lane.b32.xlu0 %v909, 32
    %v911 = vpop.permute.xlu0 %910
    %s913 = scalar_lea.vmem %s6, 8
    %914 = vst.msk [vmem:[%s913] sm:$0x3] %vm249, %v911
    %s915 = scalar_lea.vmem %s0, 20
    %v916 = vld [vmem:[%s915] sm:$0xf]
    %v917 = vpack.c.bf16 %v901, %v901
    %919 = vrot.lane.b32.xlu0 %v917, 32
    %v920 = vpop.permute.xlu0 %919
    %v922 = vsel %vm72, %v920, 0
    %924 = vmatprep.subr.bf16.mxu0 0
    %925 = vmatpush1.bf16.msra.mxu0 0
    %926 = vmatprep.subr.bf16.mxu0 0
    %927 = vmatpush1.bf16.msra.mxu0 0
    %928 = vmatprep.subr.bf16.mxu0 0
    %929 = vmatpush1.bf16.msra.mxu0 0
    %930 = vmatprep.subr.bf16.mxu0 0
    %931 = vmatpush1.bf16.msra.mxu0 0
    %932 = vmatprep.subr.bf16.mxu0 0
    %933 = vmatpush1.bf16.msra.mxu0 0
    %934 = vmatprep.subr.bf16.mxu0 0
    %935 = vmatpush1.bf16.msra.mxu0 0
    %936 = vmatprep.subr.bf16.mxu0 %v67
    %937 = vmatpush1.bf16.msra.mxu0 %v66
    %938 = vmatprep.subr.bf16.mxu0 %v65
    %939 = vmatpush1.bf16.msra.mxu0 %v64
    %940 = vmatprep.subr.bf16.mxu0 0
    %941 = vmatpush2.bf16.msra.mxu0 0
    %942 = vmatprep.subr.bf16.mxu0 0
    %943 = vmatpush2.bf16.msra.mxu0 0
    %944 = vmatprep.subr.bf16.mxu0 0
    %945 = vmatpush2.bf16.msra.mxu0 0
    %946 = vmatprep.subr.bf16.mxu0 0
    %947 = vmatpush2.bf16.msra.mxu0 0
    %948 = vmatprep.subr.bf16.mxu0 0
    %949 = vmatpush2.bf16.msra.mxu0 0
    %950 = vmatprep.subr.bf16.mxu0 0
    %951 = vmatpush2.bf16.msra.mxu0 0
    %952 = vmatprep.subr.bf16.mxu0 0
    %953 = vmatpush2.bf16.msra.mxu0 0
    %954 = vmatprep.subr.bf16.mxu0 0
    %955 = vmatpush2.bf16.msra.mxu0 0
    %956 = vmatprep.mubr.bf16.mxu0 0
    %957 = vmatmul.mubr.bf16.gmra.mxu0 %v922
    %v958 = vpop.f32.mrf.mxu0
    %v959 = vadd.f32 0.0, %v958
    %v960 = vpop.f32.mrf.mxu0
    %v961 = vadd.f32 0.0, %v960
    %v962 = vpop.f32.mrf.mxu0
    %v963 = vpop.f32.mrf.mxu0
    %964 = vdwg.mxu0
    %v967 = vcombine.low %v959, %v961
    %v969 = vunpack.c.l.s4 1983009808
    %v970 = vunpack.c.0.s8 %v969
    %v971 = vlaneseq
    %v972 = vshrl.u32 %v971, 7
    %v973 = vsub.s32 %v970, %v972
    %v974 = vrot.slane %v967, %v973
    %v976 = vadd.f32 %v916, %v974
    %v977 = vxor.u32 %v976, 2147483648
    %v978 = vmul.f32 %v977, 1.442695
    %v979 = vpow.pop %v978
    %v980 = vadd.f32 %v979, 1.0
    %v981 = vrcp.pop %v980
    %v982 = vmul.f32 1.0, %v981
    %v983 = vtanh.pop %v976
    %v985 = vrot.slane %v976, 2
    %v987 = vxor.u32 %v985, 2147483648
    %v988 = vmul.f32 %v987, 1.442695
    %v989 = vpow.pop %v988
    %v990 = vadd.f32 %v989, 1.0
    %v991 = vrcp.pop %v990
    %v992 = vmul.f32 1.0, %v991
    %v993 = vmul.f32 %v992, %v827
    %v994 = vmul.f32 %v982, %v895
    %996 = vrot.lane.b32.xlu0 %v983, 64
    %v997 = vpop.permute.xlu0 %996
    %v999 = vmul.f32 %v982, %v997
    %1001 = vrot.lane.b32.xlu0 %v999, 32
    %v1002 = vpop.permute.xlu0 %1001
    %v1004 = vadd.f32 %v994, %v1002
    %v1005 = vpack.c.bf16 %v993, %v993
    %v1007 = vsel %vm175, %v1005, 0
    %1009 = vmatprep.subr.bf16.mxu0 0
    %1010 = vmatpush1.bf16.msra.mxu0 0
    %1011 = vmatprep.subr.bf16.mxu0 0
    %1012 = vmatpush1.bf16.msra.mxu0 0
    %1013 = vmatprep.subr.bf16.mxu0 0
    %1014 = vmatpush1.bf16.msra.mxu0 0
    %1015 = vmatprep.subr.bf16.mxu0 0
    %1016 = vmatpush1.bf16.msra.mxu0 0
    %1017 = vmatprep.subr.bf16.mxu0 0
    %1018 = vmatpush1.bf16.msra.mxu0 0
    %1019 = vmatprep.subr.bf16.mxu0 0
    %1020 = vmatpush1.bf16.msra.mxu0 0
    %1021 = vmatprep.subr.bf16.mxu0 0
    %1022 = vmatpush1.bf16.msra.mxu0 0
    %1023 = vmatprep.subr.bf16.mxu0 0
    %1024 = vmatpush1.bf16.msra.mxu0 %v173
    %1025 = vmatprep.subr.bf16.mxu0 0
    %1026 = vmatpush2.bf16.msra.mxu0 0
    %1027 = vmatprep.subr.bf16.mxu0 0
    %1028 = vmatpush2.bf16.msra.mxu0 0
    %1029 = vmatprep.subr.bf16.mxu0 0
    %1030 = vmatpush2.bf16.msra.mxu0 0
    %1031 = vmatprep.subr.bf16.mxu0 0
    %1032 = vmatpush2.bf16.msra.mxu0 0
    %1033 = vmatprep.subr.bf16.mxu0 0
    %1034 = vmatpush2.bf16.msra.mxu0 0
    %1035 = vmatprep.subr.bf16.mxu0 0
    %1036 = vmatpush2.bf16.msra.mxu0 0
    %1037 = vmatprep.subr.bf16.mxu0 0
    %1038 = vmatpush2.bf16.msra.mxu0 0
    %1039 = vmatprep.subr.bf16.mxu0 0
    %1040 = vmatpush2.bf16.msra.mxu0 0
    %1041 = vmatprep.mubr.bf16.mxu0 0
    %1042 = vmatmul.mubr.bf16.gmra.mxu0 %v1007
    %v1043 = vpop.f32.mrf.mxu0
    %v1044 = vadd.f32 0.0, %v1043
    %v1045 = vpop.f32.mrf.mxu0
    %v1046 = vpop.f32.mrf.mxu0
    %v1047 = vpop.f32.mrf.mxu0
    %1048 = vdwg.mxu0
    %v1049 = vtanh.pop %v1044
    %v1052 = vunpack.c.l.s4 1983009808
    %v1053 = vunpack.c.0.s8 %v1052
    %v1054 = vlaneseq
    %v1055 = vshrl.u32 %v1054, 7
    %v1056 = vsub.s32 %v1053, %v1055
    %v1057 = vrot.slane %v1049, %v1056
    %1058 = vrot.lane.b32.xlu0 %v1057, 32
    %v1059 = vpop.permute.xlu0 %1058
    %v1061 = vadd.f32 %v1004, %v1059
    %v1062 = vtanh.pop %v1061
    %1064 = vrot.lane.b32.xlu0 %v1062, 64
    %v1065 = vpop.permute.xlu0 %1064
    %v1067 = vmul.f32 %v982, %v1065
    %v1070 = vunpack.c.l.s4 1983009808
    %v1071 = vunpack.c.0.s8 %v1070
    %v1072 = vlaneseq
    %v1073 = vshrl.u32 %v1072, 7
    %v1074 = vsub.s32 %v1071, %v1073
    %v1075 = vrot.slane %v1067, %v1074
    %1076 = vrot.lane.b32.xlu0 %v1075, 32
    %v1077 = vpop.permute.xlu0 %1076
    %s1079 = scalar_lea.vmem %s6, 10
    %1080 = vst.msk [vmem:[%s1079] sm:$0x3] %vm249, %v1077
    %s1081 = scalar_lea.vmem %s0, 24
    %v1082 = vld [vmem:[%s1081] sm:$0xf]
    %v1083 = vpack.c.bf16 %v1067, %v1067
    %1085 = vrot.lane.b32.xlu0 %v1083, 32
    %v1086 = vpop.permute.xlu0 %1085
    %v1088 = vsel %vm72, %v1086, 0
    %1090 = vmatprep.subr.bf16.mxu0 0
    %1091 = vmatpush1.bf16.msra.mxu0 0
    %1092 = vmatprep.subr.bf16.mxu0 0
    %1093 = vmatpush1.bf16.msra.mxu0 0
    %1094 = vmatprep.subr.bf16.mxu0 0
    %1095 = vmatpush1.bf16.msra.mxu0 0
    %1096 = vmatprep.subr.bf16.mxu0 0
    %1097 = vmatpush1.bf16.msra.mxu0 0
    %1098 = vmatprep.subr.bf16.mxu0 0
    %1099 = vmatpush1.bf16.msra.mxu0 0
    %1100 = vmatprep.subr.bf16.mxu0 0
    %1101 = vmatpush1.bf16.msra.mxu0 0
    %1102 = vmatprep.subr.bf16.mxu0 %v67
    %1103 = vmatpush1.bf16.msra.mxu0 %v66
    %1104 = vmatprep.subr.bf16.mxu0 %v65
    %1105 = vmatpush1.bf16.msra.mxu0 %v64
    %1106 = vmatprep.subr.bf16.mxu0 0
    %1107 = vmatpush2.bf16.msra.mxu0 0
    %1108 = vmatprep.subr.bf16.mxu0 0
    %1109 = vmatpush2.bf16.msra.mxu0 0
    %1110 = vmatprep.subr.bf16.mxu0 0
    %1111 = vmatpush2.bf16.msra.mxu0 0
    %1112 = vmatprep.subr.bf16.mxu0 0
    %1113 = vmatpush2.bf16.msra.mxu0 0
    %1114 = vmatprep.subr.bf16.mxu0 0
    %1115 = vmatpush2.bf16.msra.mxu0 0
    %1116 = vmatprep.subr.bf16.mxu0 0
    %1117 = vmatpush2.bf16.msra.mxu0 0
    %1118 = vmatprep.subr.bf16.mxu0 0
    %1119 = vmatpush2.bf16.msra.mxu0 0
    %1120 = vmatprep.subr.bf16.mxu0 0
    %1121 = vmatpush2.bf16.msra.mxu0 0
    %1122 = vmatprep.mubr.bf16.mxu0 0
    %1123 = vmatmul.mubr.bf16.gmra.mxu0 %v1088
    %v1124 = vpop.f32.mrf.mxu0
    %v1125 = vadd.f32 0.0, %v1124
    %v1126 = vpop.f32.mrf.mxu0
    %v1127 = vadd.f32 0.0, %v1126
    %v1128 = vpop.f32.mrf.mxu0
    %v1129 = vpop.f32.mrf.mxu0
    %1130 = vdwg.mxu0
    %v1133 = vcombine.low %v1125, %v1127
    %v1135 = vunpack.c.l.s4 1983009808
    %v1136 = vunpack.c.0.s8 %v1135
    %v1137 = vlaneseq
    %v1138 = vshrl.u32 %v1137, 7
    %v1139 = vsub.s32 %v1136, %v1138
    %v1140 = vrot.slane %v1133, %v1139
    %v1142 = vadd.f32 %v1082, %v1140
    %v1143 = vxor.u32 %v1142, 2147483648
    %v1144 = vmul.f32 %v1143, 1.442695
    %v1145 = vpow.pop %v1144
    %v1146 = vadd.f32 %v1145, 1.0
    %v1147 = vrcp.pop %v1146
    %v1148 = vmul.f32 1.0, %v1147
    %v1149 = vtanh.pop %v1142
    %v1151 = vrot.slane %v1142, 2
    %v1153 = vxor.u32 %v1151, 2147483648
    %v1154 = vmul.f32 %v1153, 1.442695
    %v1155 = vpow.pop %v1154
    %v1156 = vadd.f32 %v1155, 1.0
    %v1157 = vrcp.pop %v1156
    %v1158 = vmul.f32 1.0, %v1157
    %v1159 = vmul.f32 %v1158, %v993
    %v1160 = vmul.f32 %v1148, %v1061
    %1162 = vrot.lane.b32.xlu0 %v1149, 64
    %v1163 = vpop.permute.xlu0 %1162
    %v1165 = vmul.f32 %v1148, %v1163
    %1167 = vrot.lane.b32.xlu0 %v1165, 32
    %v1168 = vpop.permute.xlu0 %1167
    %v1170 = vadd.f32 %v1160, %v1168
    %v1171 = vpack.c.bf16 %v1159, %v1159
    %v1173 = vsel %vm175, %v1171, 0
    %1175 = vmatprep.subr.bf16.mxu0 0
    %1176 = vmatpush1.bf16.msra.mxu0 0
    %1177 = vmatprep.subr.bf16.mxu0 0
    %1178 = vmatpush1.bf16.msra.mxu0 0
    %1179 = vmatprep.subr.bf16.mxu0 0
    %1180 = vmatpush1.bf16.msra.mxu0 0
    %1181 = vmatprep.subr.bf16.mxu0 0
    %1182 = vmatpush1.bf16.msra.mxu0 0
    %1183 = vmatprep.subr.bf16.mxu0 0
    %1184 = vmatpush1.bf16.msra.mxu0 0
    %1185 = vmatprep.subr.bf16.mxu0 0
    %1186 = vmatpush1.bf16.msra.mxu0 0
    %1187 = vmatprep.subr.bf16.mxu0 0
    %1188 = vmatpush1.bf16.msra.mxu0 0
    %1189 = vmatprep.subr.bf16.mxu0 0
    %1190 = vmatpush1.bf16.msra.mxu0 %v173
    %1191 = vmatprep.subr.bf16.mxu0 0
    %1192 = vmatpush2.bf16.msra.mxu0 0
    %1193 = vmatprep.subr.bf16.mxu0 0
    %1194 = vmatpush2.bf16.msra.mxu0 0
    %1195 = vmatprep.subr.bf16.mxu0 0
    %1196 = vmatpush2.bf16.msra.mxu0 0
    %1197 = vmatprep.subr.bf16.mxu0 0
    %1198 = vmatpush2.bf16.msra.mxu0 0
    %1199 = vmatprep.subr.bf16.mxu0 0
    %1200 = vmatpush2.bf16.msra.mxu0 0
    %1201 = vmatprep.subr.bf16.mxu0 0
    %1202 = vmatpush2.bf16.msra.mxu0 0
    %1203 = vmatprep.subr.bf16.mxu0 0
    %1204 = vmatpush2.bf16.msra.mxu0 0
    %1205 = vmatprep.subr.bf16.mxu0 0
    %1206 = vmatpush2.bf16.msra.mxu0 0
    %1207 = vmatprep.mubr.bf16.mxu0 0
    %1208 = vmatmul.mubr.bf16.gmra.mxu0 %v1173
    %v1209 = vpop.f32.mrf.mxu0
    %v1210 = vadd.f32 0.0, %v1209
    %v1211 = vpop.f32.mrf.mxu0
    %v1212 = vpop.f32.mrf.mxu0
    %v1213 = vpop.f32.mrf.mxu0
    %1214 = vdwg.mxu0
    %v1215 = vtanh.pop %v1210
    %v1218 = vunpack.c.l.s4 1983009808
    %v1219 = vunpack.c.0.s8 %v1218
    %v1220 = vlaneseq
    %v1221 = vshrl.u32 %v1220, 7
    %v1222 = vsub.s32 %v1219, %v1221
    %v1223 = vrot.slane %v1215, %v1222
    %1224 = vrot.lane.b32.xlu0 %v1223, 32
    %v1225 = vpop.permute.xlu0 %1224
    %v1227 = vadd.f32 %v1170, %v1225
    %v1228 = vtanh.pop %v1227
    %1230 = vrot.lane.b32.xlu0 %v1228, 64
    %v1231 = vpop.permute.xlu0 %1230
    %v1233 = vmul.f32 %v1148, %v1231
    %v1236 = vunpack.c.l.s4 1983009808
    %v1237 = vunpack.c.0.s8 %v1236
    %v1238 = vlaneseq
    %v1239 = vshrl.u32 %v1238, 7
    %v1240 = vsub.s32 %v1237, %v1239
    %v1241 = vrot.slane %v1233, %v1240
    %1242 = vrot.lane.b32.xlu0 %v1241, 32
    %v1243 = vpop.permute.xlu0 %1242
    %s1245 = scalar_lea.vmem %s6, 12
    %1246 = vst.msk [vmem:[%s1245] sm:$0x3] %vm249, %v1243
    %s1247 = scalar_lea.vmem %s0, 28
    %v1248 = vld [vmem:[%s1247] sm:$0xf]
    %v1249 = vpack.c.bf16 %v1233, %v1233
    %1251 = vrot.lane.b32.xlu0 %v1249, 32
    %v1252 = vpop.permute.xlu0 %1251
    %v1254 = vsel %vm72, %v1252, 0
    %1256 = vmatprep.subr.bf16.mxu0 0
    %1257 = vmatpush1.bf16.msra.mxu0 0
    %1258 = vmatprep.subr.bf16.mxu0 0
    %1259 = vmatpush1.bf16.msra.mxu0 0
    %1260 = vmatprep.subr.bf16.mxu0 0
    %1261 = vmatpush1.bf16.msra.mxu0 0
    %1262 = vmatprep.subr.bf16.mxu0 0
    %1263 = vmatpush1.bf16.msra.mxu0 0
    %1264 = vmatprep.subr.bf16.mxu0 0
    %1265 = vmatpush1.bf16.msra.mxu0 0
    %1266 = vmatprep.subr.bf16.mxu0 0
    %1267 = vmatpush1.bf16.msra.mxu0 0
    %1268 = vmatprep.subr.bf16.mxu0 %v67
    %1269 = vmatpush1.bf16.msra.mxu0 %v66
    %1270 = vmatprep.subr.bf16.mxu0 %v65
    %1271 = vmatpush1.bf16.msra.mxu0 %v64
    %1272 = vmatprep.subr.bf16.mxu0 0
    %1273 = vmatpush2.bf16.msra.mxu0 0
    %1274 = vmatprep.subr.bf16.mxu0 0
    %1275 = vmatpush2.bf16.msra.mxu0 0
    %1276 = vmatprep.subr.bf16.mxu0 0
    %1277 = vmatpush2.bf16.msra.mxu0 0
    %1278 = vmatprep.subr.bf16.mxu0 0
    %1279 = vmatpush2.bf16.msra.mxu0 0
    %1280 = vmatprep.subr.bf16.mxu0 0
    %1281 = vmatpush2.bf16.msra.mxu0 0
    %1282 = vmatprep.subr.bf16.mxu0 0
    %1283 = vmatpush2.bf16.msra.mxu0 0
    %1284 = vmatprep.subr.bf16.mxu0 0
    %1285 = vmatpush2.bf16.msra.mxu0 0
    %1286 = vmatprep.subr.bf16.mxu0 0
    %1287 = vmatpush2.bf16.msra.mxu0 0
    %1288 = vmatprep.mubr.bf16.mxu0 0
    %1289 = vmatmul.mubr.bf16.gmra.mxu0 %v1254
    %v1290 = vpop.f32.mrf.mxu0
    %v1291 = vadd.f32 0.0, %v1290
    %v1292 = vpop.f32.mrf.mxu0
    %v1293 = vadd.f32 0.0, %v1292
    %v1294 = vpop.f32.mrf.mxu0
    %v1295 = vpop.f32.mrf.mxu0
    %1296 = vdwg.mxu0
    %v1299 = vcombine.low %v1291, %v1293
    %v1301 = vunpack.c.l.s4 1983009808
    %v1302 = vunpack.c.0.s8 %v1301
    %v1303 = vlaneseq
    %v1304 = vshrl.u32 %v1303, 7
    %v1305 = vsub.s32 %v1302, %v1304
    %v1306 = vrot.slane %v1299, %v1305
    %v1308 = vadd.f32 %v1248, %v1306
    %v1309 = vxor.u32 %v1308, 2147483648
    %v1310 = vmul.f32 %v1309, 1.442695
    %v1311 = vpow.pop %v1310
    %v1312 = vadd.f32 %v1311, 1.0
    %v1313 = vrcp.pop %v1312
    %v1314 = vmul.f32 1.0, %v1313
    %v1315 = vtanh.pop %v1308
    %v1317 = vrot.slane %v1308, 2
    %v1319 = vxor.u32 %v1317, 2147483648
    %v1320 = vmul.f32 %v1319, 1.442695
    %v1321 = vpow.pop %v1320
    %v1322 = vadd.f32 %v1321, 1.0
    %v1323 = vrcp.pop %v1322
    %v1324 = vmul.f32 1.0, %v1323
    %v1325 = vmul.f32 %v1324, %v1159
    %v1326 = vmul.f32 %v1314, %v1227
    %1328 = vrot.lane.b32.xlu0 %v1315, 64
    %v1329 = vpop.permute.xlu0 %1328
    %v1331 = vmul.f32 %v1314, %v1329
    %1333 = vrot.lane.b32.xlu0 %v1331, 32
    %v1334 = vpop.permute.xlu0 %1333
    %v1336 = vadd.f32 %v1326, %v1334
    %v1337 = vpack.c.bf16 %v1325, %v1325
    %v1339 = vsel %vm175, %v1337, 0
    %1341 = vmatprep.subr.bf16.mxu0 0
    %1342 = vmatpush1.bf16.msra.mxu0 0
    %1343 = vmatprep.subr.bf16.mxu0 0
    %1344 = vmatpush1.bf16.msra.mxu0 0
    %1345 = vmatprep.subr.bf16.mxu0 0
    %1346 = vmatpush1.bf16.msra.mxu0 0
    %1347 = vmatprep.subr.bf16.mxu0 0
    %1348 = vmatpush1.bf16.msra.mxu0 0
    %1349 = vmatprep.subr.bf16.mxu0 0
    %1350 = vmatpush1.bf16.msra.mxu0 0
    %1351 = vmatprep.subr.bf16.mxu0 0
    %1352 = vmatpush1.bf16.msra.mxu0 0
    %1353 = vmatprep.subr.bf16.mxu0 0
    %1354 = vmatpush1.bf16.msra.mxu0 0
    %1355 = vmatprep.subr.bf16.mxu0 0
    %1356 = vmatpush1.bf16.msra.mxu0 %v173
    %1357 = vmatprep.subr.bf16.mxu0 0
    %1358 = vmatpush2.bf16.msra.mxu0 0
    %1359 = vmatprep.subr.bf16.mxu0 0
    %1360 = vmatpush2.bf16.msra.mxu0 0
    %1361 = vmatprep.subr.bf16.mxu0 0
    %1362 = vmatpush2.bf16.msra.mxu0 0
    %1363 = vmatprep.subr.bf16.mxu0 0
    %1364 = vmatpush2.bf16.msra.mxu0 0
    %1365 = vmatprep.subr.bf16.mxu0 0
    %1366 = vmatpush2.bf16.msra.mxu0 0
    %1367 = vmatprep.subr.bf16.mxu0 0
    %1368 = vmatpush2.bf16.msra.mxu0 0
    %1369 = vmatprep.subr.bf16.mxu0 0
    %1370 = vmatpush2.bf16.msra.mxu0 0
    %1371 = vmatprep.subr.bf16.mxu0 0
    %1372 = vmatpush2.bf16.msra.mxu0 0
    %1373 = vmatprep.mubr.bf16.mxu0 0
    %1374 = vmatmul.mubr.bf16.gmra.mxu0 %v1339
    %v1375 = vpop.f32.mrf.mxu0
    %v1376 = vadd.f32 0.0, %v1375
    %v1377 = vpop.f32.mrf.mxu0
    %v1378 = vpop.f32.mrf.mxu0
    %v1379 = vpop.f32.mrf.mxu0
    %1380 = vdwg.mxu0
    %v1381 = vtanh.pop %v1376
    %v1384 = vunpack.c.l.s4 1983009808
    %v1385 = vunpack.c.0.s8 %v1384
    %v1386 = vlaneseq
    %v1387 = vshrl.u32 %v1386, 7
    %v1388 = vsub.s32 %v1385, %v1387
    %v1389 = vrot.slane %v1381, %v1388
    %1390 = vrot.lane.b32.xlu0 %v1389, 32
    %v1391 = vpop.permute.xlu0 %1390
    %v1393 = vadd.f32 %v1336, %v1391
    %v1394 = vtanh.pop %v1393
    %1396 = vrot.lane.b32.xlu0 %v1394, 64
    %v1397 = vpop.permute.xlu0 %1396
    %v1399 = vmul.f32 %v1314, %v1397
    %v1402 = vunpack.c.l.s4 1983009808
    %v1403 = vunpack.c.0.s8 %v1402
    %v1404 = vlaneseq
    %v1405 = vshrl.u32 %v1404, 7
    %v1406 = vsub.s32 %v1403, %v1405
    %v1407 = vrot.slane %v1399, %v1406
    %1408 = vrot.lane.b32.xlu0 %v1407, 32
    %v1409 = vpop.permute.xlu0 %1408
    %s1411 = scalar_lea.vmem %s6, 14
    %1412 = vst.msk [vmem:[%s1411] sm:$0x3] %vm249, %v1409
    %1413 = vst.msk [vmem:[%s7] sm:$0x3] %vm249, %v1409
    %v1416 = vunpack.c.l.s4 1983009808
    %v1417 = vunpack.c.0.s8 %v1416
    %v1418 = vlaneseq
    %v1419 = vshrl.u32 %v1418, 7
    %v1420 = vsub.s32 %v1417, %v1419
    %v1421 = vrot.slane %v1393, %v1420
    %1422 = vrot.lane.b32.xlu0 %v1421, 96
    %v1423 = vpop.permute.xlu0 %1422
    %1425 = vst.msk [vmem:[%s8] sm:$0x3] %vm249, %v1423
    %vm1426 = vcmask 123904
    %1427 = vst.msk [vmem:[#allocation2] sm:$0x3] %vm1426, %v1325
    // Predicated region
    $region30: #{cs_lstm_forward.6} parent=1 // pred_check
      _
    $region31: #{cs_lstm_forward.6} parent=1 // pred_check_branch
      %1429 = sbr.rel (0) target = $region33
    $region32: #{cs_lstm_forward.6} parent=1 // pred_region
      _
    $region33: #{cs_lstm_forward.6} parent=1 // pred_fallthru
      _
    // Predicated region
    $region34: #{cs_lstm_forward.6} parent=1 // pred_check
      _
    $region35: #{cs_lstm_forward.6} parent=1 // pred_check_branch
      %1431 = sbr.rel (0) target = $region37
    $region36: #{cs_lstm_forward.6} parent=1 // pred_region
      _
    $region37: #{cs_lstm_forward.6} parent=1 // pred_fallthru
      _
    // Predicated region
    $region38: #{cs_lstm_forward.6} parent=1 // pred_check
      _
    $region39: #{cs_lstm_forward.6} parent=1 // pred_check_branch
      %1433 = sbr.rel (0) target = $region41
    $region40: #{cs_lstm_forward.6} parent=1 // pred_region
      _
    $region41: #{cs_lstm_forward.6} parent=1 // pred_fallthru
      _
    // Predicated region
    $region42: #{cs_lstm_forward.6} parent=1 // pred_check
      _
    $region43: #{cs_lstm_forward.6} parent=1 // pred_check_branch
      %1435 = sbr.rel (0) target = $region45
    $region44: #{cs_lstm_forward.6} parent=1 // pred_region
      %s1437 = ssub.s32 32, 32
      %1438 = vsyncadd [#allocation3], %s1437
      %s1440 = sshll.u32 [#allocation2], 4
      %s1441 = int_to_ptr.vmem [resolvable:$true] %s1440
      %1443 = dma.vmem_to_hbm [thread:$0]  %s1441, 32, %s9, [#allocation3]
    $region45: #{cs_lstm_forward.6} parent=1 // pred_fallthru
      _
    // Predicated region
    $region46: #{cs_lstm_forward.6} parent=1 // pred_check
      _
    $region47: #{cs_lstm_forward.6} parent=1 // pred_check_branch
      %1445 = sbr.rel (0) target = $region49
    $region48: #{cs_lstm_forward.6} parent=1 // pred_region
      _
    $region49: #{cs_lstm_forward.6} parent=1 // pred_fallthru
      _
    // Predicated region
    $region50: #{cs_lstm_forward.6} parent=1 // pred_check
      _
    $region51: #{cs_lstm_forward.6} parent=1 // pred_check_branch
      %1447 = sbr.rel (0) target = $region53
    $region52: #{cs_lstm_forward.6} parent=1 // pred_region
      _
    $region53: #{cs_lstm_forward.6} parent=1 // pred_fallthru
      _
    // Predicated region
    $region54: #{cs_lstm_forward.6} parent=1 // pred_check
      _
    $region55: #{cs_lstm_forward.6} parent=1 // pred_check_branch
      %1449 = sbr.rel (0) target = $region57
    $region56: #{cs_lstm_forward.6} parent=1 // pred_region
      _
    $region57: #{cs_lstm_forward.6} parent=1 // pred_fallthru
      _
    // Predicated region
    $region58: #{cs_lstm_forward.6} parent=1 // pred_check
      _
    $region59: #{cs_lstm_forward.6} parent=1 // pred_check_branch
      %1451 = sbr.rel (0) target = $region61
    $region60: #{cs_lstm_forward.6} parent=1 // pred_region
      %1452 = dma.done [#allocation3], 32
    $region61: #{cs_lstm_forward.6} parent=1 // pred_fallthru
      _
    %1453 = vsyncpa [#allocation3], 1

</llo_original>
